<compile_context>
chip_gen: v6e
topology: v6e:2x2x1
jax: 0.10.0
libtpu: 0.0.40
codegen_flags: <defaults>
</compile_context>

<pallas_src>
from functools import partial

import jax
import jax.numpy as jnp
from jax import lax
from jax.experimental import pallas as pl
from jax.experimental.pallas import tpu as pltpu

MIN_SCORE = 0.5          # SAGPooling(min_score=0.5)
TOL = 1e-7               # torch_geometric topk tolerance
BN_EPS = 1e-5            # torch.nn.BatchNorm1d default eps
NEG_INF = -1e30
MXU_DTYPE = jnp.bfloat16          # MXU inputs only; accumulation & VPU math stay f32
VMEM_LIMIT = 48 * 1024 * 1024     # explicit scoped-VMEM cap, safe on v5e/v6e/v7x


# ----------------------------------------------------------------------------
# Kernel 1: ALL SAGPooling layers fused, gridded over graphs ("parallel").
#   per layer: score = GraphConv(H,1) -> softmax (per graph) -> min_score keep
#              x <- x * (score*keep) ; node_mask <- node_mask * keep
#   finally:   EdgeConv block-1 node projections xa = x@(w1_i - w1_j), xb = x@w1_j
# ----------------------------------------------------------------------------
def make_sag_kernel(num_layers):
    def sag_kernel(x_ref, adj_ref, wpool_ref, bpool_ref, w1d_ref, w1s_ref,
                   xo_ref, nm_ref, xa_ref, xb_ref):
        x = x_ref[...]                                   # [npg, H]  one graph
        adj = adj_ref[0]                                 # [npg, npg] adj[i,j] = #edges j->i
        npg = x.shape[0]
        nmask = jnp.ones((npg, 1), jnp.float32)

        for l in range(num_layers):                      # static unroll; x stays resident
            w = wpool_ref[l]                             # [H, 2]  (w_rel | w_root)
            b = bpool_ref[l]                             # [1, 1]
            # GraphConv(H,1) reassociated: adj @ (x @ w_rel) + x @ w_root + b
            xw = jnp.dot(x.astype(MXU_DTYPE), w.astype(MXU_DTYPE),
                         preferred_element_type=jnp.float32)            # [npg, 2]
            raw = (jnp.dot(adj.astype(MXU_DTYPE), xw[:, 0:1].astype(MXU_DTYPE),
                           preferred_element_type=jnp.float32)
                   + xw[:, 1:2] + b)                                     # [npg, 1]

            # softmax over currently-valid nodes of this graph (all f32)
            valid = nmask > 0.0
            masked = jnp.where(valid, raw, NEG_INF)
            gmax = jnp.max(masked, axis=0, keepdims=True)
            exps = jnp.exp(masked - gmax)                # invalid -> exp(-huge) = 0
            score = exps / jnp.maximum(jnp.sum(exps, axis=0, keepdims=True), 1e-30)

            # topk(min_score): keep score > min(max_score - tol, min_score)
            smax = jnp.max(score, axis=0, keepdims=True)
            thr = jnp.minimum(smax - TOL, MIN_SCORE)
            keep = jnp.logical_and(score > thr, valid).astype(jnp.float32)

            s = score * keep                             # fused score*keep scale
            x = x * s
            nmask = nmask * keep

        xo_ref[...] = x
        nm_ref[...] = nmask
        # EdgeConv block-1 reassociation (h1_e = xa[dst] + xb[src] + b1)
        xa_ref[...] = jnp.dot(x.astype(MXU_DTYPE), w1d_ref[...].astype(MXU_DTYPE),
                              preferred_element_type=jnp.float32)
        xb_ref[...] = jnp.dot(x.astype(MXU_DTYPE), w1s_ref[...].astype(MXU_DTYPE),
                              preferred_element_type=jnp.float32)

    return sag_kernel


# ----------------------------------------------------------------------------
# Kernel 2: EdgeConv MLP over edges + max aggregation.
#   grid = (3 phases, E tiles), both "arbitrary":
#     phase 0: BN1 statistics (running masked sum / sumsq / count)
#     phase 1: apply folded BN1, Lin2+ReLU, BN2 statistics
#     phase 2: apply folded BN2, scatter-max into running per-node max (VMEM scratch)
#   dst indices arrive via scalar prefetch (SMEM); invalid edges point at a dump row.
# ----------------------------------------------------------------------------
def edge_mlp_kernel(dst_ref,                       # SMEM [E_pad] int32 (invalid -> N)
                    h1pre_ref, emask_ref, w2_ref, b2_ref,
                    g1_ref, be1_ref, g2_ref, be2_ref,
                    xp_ref,
                    sum1, sumsq1, sum2, sumsq2, cnt,
                    scale1, shift1, scale2, shift2,
                    run_max, msg_buf):
    p = pl.program_id(0)                            # phase
    e = pl.program_id(1)                            # edge tile
    ne = pl.num_programs(1)
    tile_e = h1pre_ref.shape[0]

    @pl.when(jnp.logical_and(p == 0, e == 0))
    def _init():
        sum1[...] = jnp.zeros_like(sum1)
        sumsq1[...] = jnp.zeros_like(sumsq1)
        sum2[...] = jnp.zeros_like(sum2)
        sumsq2[...] = jnp.zeros_like(sumsq2)
        cnt[...] = jnp.zeros_like(cnt)
        run_max[...] = jnp.full(run_max.shape, NEG_INF, jnp.float32)

    em = emask_ref[...]                             # [tile_e, 1]
    h1 = jnp.maximum(h1pre_ref[...], 0.0)           # ReLU(Lin1), recomputed per phase

    def compute_h2():
        h1n = h1 * scale1[...] + shift1[...]        # folded BN1
        h2 = jnp.dot(h1n.astype(MXU_DTYPE), w2_ref[...].astype(MXU_DTYPE),
                     preferred_element_type=jnp.float32) + b2_ref[...]
        return jnp.maximum(h2, 0.0)                 # ReLU(Lin2)   [tile_e, H]

    @pl.when(p == 0)
    def _stats1():
        hm = h1 * em
        sum1[...] += jnp.sum(hm, axis=0, keepdims=True)
        sumsq1[...] += jnp.sum(h1 * hm, axis=0, keepdims=True)
        cnt[...] += jnp.sum(em, axis=0, keepdims=True)

    @pl.when(jnp.logical_and(p == 0, e == ne - 1))
    def _fin1():
        inv = 1.0 / jnp.maximum(cnt[...], 1.0)
        mean = sum1[...] * inv
        var = jnp.maximum(sumsq1[...] * inv - mean * mean, 0.0)
        s = g1_ref[...] * lax.rsqrt(var + BN_EPS)
        scale1[...] = s
        shift1[...] = be1_ref[...] - mean * s

    @pl.when(p == 1)
    def _stats2():
        h2 = compute_h2()
        h2m = h2 * em
        sum2[...] += jnp.sum(h2m, axis=0, keepdims=True)
        sumsq2[...] += jnp.sum(h2 * h2m, axis=0, keepdims=True)

    @pl.when(jnp.logical_and(p == 1, e == ne - 1))
    def _fin2():
        inv = 1.0 / jnp.maximum(cnt[...], 1.0)
        mean = sum2[...] * inv
        var = jnp.maximum(sumsq2[...] * inv - mean * mean, 0.0)
        s = g2_ref[...] * lax.rsqrt(var + BN_EPS)
        scale2[...] = s
        shift2[...] = be2_ref[...] - mean * s

    @pl.when(p == 2)
    def _aggregate():
        msg = compute_h2() * scale2[...] + shift2[...]          # folded BN2, [tile_e, H]
        msg_buf[...] = msg[:, None, :]                          # [tile_e, 1, H]
        base = e * tile_e

        # O(E*H) running segment-max: dst comes from SMEM, invalid edges hit dump row N.
        @pl.loop(0, tile_e)
        def _scatter(i):
            d = dst_ref[base + i]
            run_max[d] = jnp.maximum(run_max[d], msg_buf[i])

    @pl.when(jnp.logical_and(p == 2, e == ne - 1))
    def _finalize():
        acc = run_max[...]                                      # [N+1, 1, H]
        xp_ref[...] = acc[0:xp_ref.shape[0], 0, :]


# ----------------------------------------------------------------------------
# Wrapper / glue (jit-fused)
# ----------------------------------------------------------------------------
@partial(jax.jit, static_argnames=("num_graphs",))
def obj_graph_forward(params, x, edge_index, batch, num_graphs):
    x = x.astype(jnp.float32)
    N, H = x.shape
    B = num_graphs
    L = len(params["pools"])
    E = edge_index.shape[1]
    src, dst = edge_index[0], edge_index[1]

    # TODO(synk): the per-graph grid assumes a PyG-style contiguous batch with
    #             equal-sized graphs; ragged batches need padding to max nodes/graph.
    assert N % B == 0
    npg = N // B
    assert npg % 8 == 0 or B == 1

    local = jnp.arange(N, dtype=jnp.int32) - batch * npg
    adj_b = jnp.zeros((B, npg, npg), jnp.float32).at[
        batch[dst], local[dst], local[src]].add(1.0)            # block-diagonal adjacency

    w_pool = jnp.stack([jnp.concatenate([p["w_rel"], p["w_root"]], axis=1)
                        for p in params["pools"]])              # [L, H, 2]
    b_pool = jnp.stack([p["b_rel"] for p in params["pools"]])   # [L, 1, 1]

    m = params["mlp"]
    w1 = m["w1"]                                                # [2H, 3H]
    w1_dst = w1[:H] - w1[H:]                                    # multiplies x_i
    w1_src = w1[H:]                                             # multiplies x_j
    C1 = w1.shape[1]                                            # 3H

    # ---- all SAGPooling layers + block-1 node projections, one pallas_call ----
    x_p, nmask, xa, xb = pl.pallas_call(
        make_sag_kernel(L),
        out_shape=(jax.ShapeDtypeStruct((N, H), jnp.float32),
                   jax.ShapeDtypeStruct((N, 1), jnp.float32),
                   jax.ShapeDtypeStruct((N, C1), jnp.float32),
                   jax.ShapeDtypeStruct((N, C1), jnp.float32)),
        grid=(B,),
        in_specs=[pl.BlockSpec((npg, H), lambda g: (g, 0)),
                  pl.BlockSpec((1, npg, npg), lambda g: (g, 0, 0)),
                  pl.BlockSpec((L, H, 2), lambda g: (0, 0, 0)),
                  pl.BlockSpec((L, 1, 1), lambda g: (0, 0, 0)),
                  pl.BlockSpec((H, C1), lambda g: (0, 0)),
                  pl.BlockSpec((H, C1), lambda g: (0, 0))],
        out_specs=(pl.BlockSpec((npg, H), lambda g: (g, 0)),
                   pl.BlockSpec((npg, 1), lambda g: (g, 0)),
                   pl.BlockSpec((npg, C1), lambda g: (g, 0)),
                   pl.BlockSpec((npg, C1), lambda g: (g, 0))),
        compiler_params=pltpu.CompilerParams(
            dimension_semantics=("parallel",),
            vmem_limit_bytes=VMEM_LIMIT),
    )(x, adj_b, w_pool, b_pool, w1_dst, w1_src)

    # ---- EdgeConv (dynamics_conv): streamed edge tiles, 3 BN phases, scatter-max ----
    edge_mask = nmask[src] * nmask[dst]                         # [E, 1] both endpoints kept
    h1pre = xa[dst] + xb[src] + m["b1"]                         # [E, 3H] pre-ReLU block-1
    dst_eff = jnp.where(edge_mask[:, 0] > 0.0, dst, N).astype(jnp.int32)

    TILE_E = 128 if E >= 256 else 16
    E_pad = ((E + TILE_E - 1) // TILE_E) * TILE_E
    if E_pad != E:
        h1pre = jnp.pad(h1pre, ((0, E_pad - E), (0, 0)))
        edge_mask_k = jnp.pad(edge_mask, ((0, E_pad - E), (0, 0)))
        dst_eff = jnp.pad(dst_eff, (0, E_pad - E), constant_values=N)
    else:
        edge_mask_k = edge_mask
    n_tiles = E_pad // TILE_E

    grid_spec = pltpu.PrefetchScalarGridSpec(
        num_scalar_prefetch=1,
        grid=(3, n_tiles),
        in_specs=[pl.BlockSpec((TILE_E, C1), lambda p, e, d: (e, 0)),
                  pl.BlockSpec((TILE_E, 1), lambda p, e, d: (e, 0)),
                  pl.BlockSpec((C1, H), lambda p, e, d: (0, 0)),
                  pl.BlockSpec((1, H), lambda p, e, d: (0, 0)),
                  pl.BlockSpec((1, C1), lambda p, e, d: (0, 0)),
                  pl.BlockSpec((1, C1), lambda p, e, d: (0, 0)),
                  pl.BlockSpec((1, H), lambda p, e, d: (0, 0)),
                  pl.BlockSpec((1, H), lambda p, e, d: (0, 0))],
        out_specs=pl.BlockSpec((N, H), lambda p, e, d: (0, 0)),
        scratch_shapes=[pltpu.VMEM((1, C1), jnp.float32),        # sum1
                        pltpu.VMEM((1, C1), jnp.float32),        # sumsq1
                        pltpu.VMEM((1, H), jnp.float32),         # sum2
                        pltpu.VMEM((1, H), jnp.float32),         # sumsq2
                        pltpu.VMEM((1, 1), jnp.float32),         # valid-edge count
                        pltpu.VMEM((1, C1), jnp.float32),        # BN1 scale
                        pltpu.VMEM((1, C1), jnp.float32),        # BN1 shift
                        pltpu.VMEM((1, H), jnp.float32),         # BN2 scale
                        pltpu.VMEM((1, H), jnp.float32),         # BN2 shift
                        pltpu.VMEM((N + 1, 1, H), jnp.float32),  # running max (+dump row)
                        pltpu.VMEM((TILE_E, 1, H), jnp.float32)])  # msg tile

    xp_raw = pl.pallas_call(
        edge_mlp_kernel,
        out_shape=jax.ShapeDtypeStruct((N, H), jnp.float32),
        grid_spec=grid_spec,
        compiler_params=pltpu.CompilerParams(
            dimension_semantics=("arbitrary", "arbitrary"),
            vmem_limit_bytes=VMEM_LIMIT),
    )(dst_eff, h1pre, edge_mask_k, m["w2"], m["b2"],
      m["g1"], m["be1"], m["g2"], m["be2"])

    # exact has-incoming-edge gate (replaces the old NEG_INF-sentinel test)
    deg = jnp.zeros((N,), jnp.float32).at[dst].add(edge_mask[:, 0])
    gate = jnp.logical_and(deg[:, None] > 0.0, nmask > 0.0)
    xp = jnp.where(gate, xp_raw, 0.0)

    # L1Loss(xp, x) over the pooled graph: kept_nodes * H elements
    nk = jnp.maximum(jnp.sum(nmask), 1.0)
    loss = jnp.sum(jnp.abs(xp - x_p)) / (nk * H)

    # ---- to_dense_batch: pack kept nodes per graph, static pad to npg rows ----
    # TODO(synk): torch returns [B, max_kept_nodes, H]; static TPU shapes pad to npg.
    nm = nmask[:, 0].reshape(B, npg)
    pos = (jnp.cumsum(nm, axis=1) - nm).astype(jnp.int32)
    row = jnp.where(nm > 0.0, pos, npg)                 # dropped nodes -> dump row
    gidx = jnp.arange(B, dtype=jnp.int32)[:, None]

    def to_dense(feats):
        fb = feats.reshape(B, npg, H)
        dense = jnp.zeros((B, npg + 1, H), feats.dtype).at[gidx, row].set(fb)
        return dense[:, :npg, :]

    return to_dense(x_p), to_dense(xp), loss


def init_params(key, hidden_dim, num_layers):
    h = hidden_dim
    c0, c1, c2 = 2 * h, 3 * h, h             # channels = [2H, 3H, H]
    keys = jax.random.split(key, 3 * num_layers + 4)
    pools = []
    for i in range(num_layers):
        k_rel, k_root, k_b = keys[3 * i], keys[3 * i + 1], keys[3 * i + 2]
        pools.append(dict(
            w_rel=jax.random.normal(k_rel, (h, 1), jnp.float32) * 0.2,
            w_root=jax.random.normal(k_root, (h, 1), jnp.float32) * 0.2,
            b_rel=jax.random.normal(k_b, (1, 1), jnp.float32) * 0.1,
        ))
    ka, kb, kc, kd = keys[3 * num_layers: 3 * num_layers + 4]
    mlp = dict(
        w1=jax.random.normal(ka, (c0, c1), jnp.float32) / jnp.sqrt(float(c0)),
        b1=jax.random.normal(kb, (1, c1), jnp.float32) * 0.05,
        g1=jnp.ones((1, c1), jnp.float32),
        be1=jnp.zeros((1, c1), jnp.float32),
        w2=jax.random.normal(kc, (c1, c2), jnp.float32) / jnp.sqrt(float(c1)),
        b2=jax.random.normal(kd, (1, c2), jnp.float32) * 0.05,
        g2=jnp.ones((1, c2), jnp.float32),
        be2=jnp.zeros((1, c2), jnp.float32),
    )
    return dict(pools=pools, mlp=mlp)


if __name__ == "__main__":
    hidden_dim = 32
    num_layers = 2
    nodes_per_graph = 8
    num_graphs = 2
    N = nodes_per_graph * num_graphs

    key = jax.random.PRNGKey(0)
    kx, kp = jax.random.split(key)
    x = jax.random.normal(kx, (N, hidden_dim), jnp.float32)

    # bidirectional ring + self loops inside each graph (self loops keep some edges
    # valid after pooling so the aggregation / BN-stats paths are exercised)
    src_l, dst_l = [], []
    for g in range(num_graphs):
        off = g * nodes_per_graph
        for i in range(nodes_per_graph):
            a = off + i
            b = off + (i + 1) % nodes_per_graph
            src_l += [a, b, a]
            dst_l += [b, a, a]
    edge_index = jnp.array([src_l, dst_l], dtype=jnp.int32)      # [2, E] with E = 48
    batch = jnp.array([g for g in range(num_graphs) for _ in range(nodes_per_graph)],
                      dtype=jnp.int32)                            # [N]

    params = init_params(kp, hidden_dim, num_layers)
    batched_x, batched_xp, penalty = obj_graph_forward(params, x, edge_index, batch,
                                                       num_graphs)
    jax.block_until_ready((batched_x, batched_xp, penalty))
    print("KERNEL_OK")
</pallas_src>

<mosaic_0001>
module attributes {stable_mosaic.version = 11 : i64} {
  func.func private @main(%arg0: i32) attributes {dimension_semantics = [#tpu.dimension_semantics<core_parallel>], iteration_bounds = array<i64: 2>, tpu.core_type = #tpu.core_type<sc_scalar_subcore>, window_params = []} {
    return
  }
}

module attributes {stable_mosaic.version = 11 : i64} {
  func.func private @main(%arg0: i32) attributes {dimension_semantics = [#tpu.dimension_semantics<core_parallel>], iteration_bounds = array<i64: 2>, tpu.core_type = #tpu.core_type<sc_scalar_subcore>, window_params = []} {
    return
  }
}

module attributes {stable_mosaic.version = 11 : i64} {
  func.func @sag_kernel(%arg0: i32, %arg1: memref<8x32xf32, #tpu.memory_space<vmem>>, %arg2: memref<1x8x8xf32, #tpu.memory_space<vmem>>, %arg3: memref<2x32x2xf32, #tpu.memory_space<vmem>>, %arg4: memref<2x1x1xf32, #tpu.memory_space<vmem>>, %arg5: memref<32x96xf32, #tpu.memory_space<vmem>>, %arg6: memref<32x96xf32, #tpu.memory_space<vmem>>, %arg7: memref<8x32xf32, #tpu.memory_space<vmem>>, %arg8: memref<8x1xf32, #tpu.memory_space<vmem>>, %arg9: memref<8x96xf32, #tpu.memory_space<vmem>>, %arg10: memref<8x96xf32, #tpu.memory_space<vmem>>) attributes {dimension_semantics = [#tpu.dimension_semantics<parallel>], iteration_bounds = array<i64: 2>, scalar_prefetch = 0 : i64, scratch_operands = 0 : i64, tpu.core_type = #tpu.core_type<tc>, window_params = [{transform_indices = @transform_0, window_bounds = array<i64: 8, 32>}, {transform_indices = @transform_1, window_bounds = array<i64: 1, 8, 8>}, {pipeline_mode = #tpu.pipeline_mode<synchronous>, transform_indices = @transform_2, window_bounds = array<i64: 2, 32, 2>}, {pipeline_mode = #tpu.pipeline_mode<synchronous>, transform_indices = @transform_3, window_bounds = array<i64: 2, 1, 1>}, {pipeline_mode = #tpu.pipeline_mode<synchronous>, transform_indices = @transform_4, window_bounds = array<i64: 32, 96>}, {pipeline_mode = #tpu.pipeline_mode<synchronous>, transform_indices = @transform_5, window_bounds = array<i64: 32, 96>}, {transform_indices = @transform_6, window_bounds = array<i64: 8, 32>}, {transform_indices = @transform_7, window_bounds = array<i64: 8, 1>}, {transform_indices = @transform_8, window_bounds = array<i64: 8, 96>}, {transform_indices = @transform_9, window_bounds = array<i64: 8, 96>}]} {
    %c0 = arith.constant 0 : index
    %c0_0 = arith.constant 0 : index
    %0 = vector.load %arg1[%c0, %c0_0] : memref<8x32xf32, #tpu.memory_space<vmem>>, vector<8x32xf32>
    %c0_1 = arith.constant 0 : index
    %c0_2 = arith.constant 0 : index
    %c0_3 = arith.constant 0 : index
    %1 = vector.load %arg2[%c0_1, %c0_2, %c0_3] : memref<1x8x8xf32, #tpu.memory_space<vmem>>, vector<1x8x8xf32>
    %2 = vector.shape_cast %1 : vector<1x8x8xf32> to vector<8x8xf32>
    %cst = arith.constant 1.000000e+00 : f32
    %3 = vector.broadcast %cst : f32 to vector<8x1xf32>
    %c0_4 = arith.constant 0 : index
    %c0_5 = arith.constant 0 : index
    %c0_6 = arith.constant 0 : index
    %4 = vector.load %arg3[%c0_4, %c0_5, %c0_6] : memref<2x32x2xf32, #tpu.memory_space<vmem>>, vector<1x32x2xf32>
    %5 = vector.shape_cast %4 : vector<1x32x2xf32> to vector<32x2xf32>
    %c0_7 = arith.constant 0 : index
    %c0_8 = arith.constant 0 : index
    %c0_9 = arith.constant 0 : index
    %6 = vector.load %arg4[%c0_7, %c0_8, %c0_9] : memref<2x1x1xf32, #tpu.memory_space<vmem>>, vector<1x1x1xf32>
    %7 = vector.shape_cast %6 : vector<1x1x1xf32> to vector<1x1xf32>
    %8 = arith.truncf %0 : vector<8x32xf32> to vector<8x32xbf16>
    %9 = arith.truncf %5 : vector<32x2xf32> to vector<32x2xbf16>
    %cst_10 = arith.constant dense<0.000000e+00> : vector<8x2xf32>
    %10 = tpu.matmul %8, %9, %cst_10 {dimension_numbers = #tpu.dot_dimension_numbers<[1], [0], [0], [1], [0, 0, 1, 1], [], []>} : vector<8x32xbf16>, vector<32x2xbf16>, vector<8x2xf32> -> vector<8x2xf32>
    %11 = arith.truncf %2 : vector<8x8xf32> to vector<8x8xbf16>
    %12 = vector.extract_strided_slice %10 {offsets = [0, 0], sizes = [8, 1], strides = [1, 1]} : vector<8x2xf32> to vector<8x1xf32>
    %13 = arith.truncf %12 : vector<8x1xf32> to vector<8x1xbf16>
    %cst_11 = arith.constant dense<0.000000e+00> : vector<8x1xf32>
    %14 = tpu.matmul %11, %13, %cst_11 {dimension_numbers = #tpu.dot_dimension_numbers<[1], [0], [0], [1], [0, 0, 1, 1], [], []>} : vector<8x8xbf16>, vector<8x1xbf16>, vector<8x1xf32> -> vector<8x1xf32>
    %15 = vector.extract_strided_slice %10 {offsets = [0, 1], sizes = [8, 1], strides = [1, 1]} : vector<8x2xf32> to vector<8x1xf32>
    %16 = arith.addf %14, %15 : vector<8x1xf32>
    %17 = vector.broadcast %7 : vector<1x1xf32> to vector<8x1xf32>
    %18 = arith.addf %16, %17 : vector<8x1xf32>
    %cst_12 = arith.constant 0.000000e+00 : f32
    %19 = vector.broadcast %cst_12 : f32 to vector<8x1xf32>
    %20 = arith.cmpf ogt, %3, %19 : vector<8x1xf32>
    %cst_13 = arith.constant -1.000000e+30 : f32
    %21 = vector.broadcast %cst_13 : f32 to vector<8x1xf32>
    %22 = arith.select %20, %18, %21 : vector<8x1xi1>, vector<8x1xf32>
    %cst_14 = arith.constant dense<0xFF800000> : vector<1xf32>
    %23 = vector.multi_reduction <maximumf>, %22, %cst_14 [0] : vector<8x1xf32> to vector<1xf32>
    %24 = vector.shape_cast %23 : vector<1xf32> to vector<1x1xf32>
    %25 = vector.broadcast %24 : vector<1x1xf32> to vector<8x1xf32>
    %26 = arith.subf %22, %25 : vector<8x1xf32>
    %27 = math.exp %26 : vector<8x1xf32>
    %cst_15 = arith.constant dense<0.000000e+00> : vector<1xf32>
    %28 = vector.multi_reduction <add>, %27, %cst_15 [0] : vector<8x1xf32> to vector<1xf32>
    %29 = vector.shape_cast %28 : vector<1xf32> to vector<1x1xf32>
    %cst_16 = arith.constant 1.000000e-30 : f32
    %30 = vector.broadcast %cst_16 : f32 to vector<1x1xf32>
    %31 = arith.maximumf %29, %30 : vector<1x1xf32>
    %32 = vector.broadcast %31 : vector<1x1xf32> to vector<8x1xf32>
    %33 = arith.divf %27, %32 : vector<8x1xf32>
    %cst_17 = arith.constant dense<0xFF800000> : vector<1xf32>
    %34 = vector.multi_reduction <maximumf>, %33, %cst_17 [0] : vector<8x1xf32> to vector<1xf32>
    %35 = vector.shape_cast %34 : vector<1xf32> to vector<1x1xf32>
    %cst_18 = arith.constant 1.000000e-07 : f32
    %36 = vector.broadcast %cst_18 : f32 to vector<1x1xf32>
    %37 = arith.subf %35, %36 : vector<1x1xf32>
    %cst_19 = arith.constant 5.000000e-01 : f32
    %38 = vector.broadcast %cst_19 : f32 to vector<1x1xf32>
    %39 = arith.minimumf %37, %38 : vector<1x1xf32>
    %40 = vector.broadcast %39 : vector<1x1xf32> to vector<8x1xf32>
    %41 = arith.cmpf ogt, %33, %40 : vector<8x1xf32>
    %42 = arith.andi %41, %20 : vector<8x1xi1>
    %43 = arith.extui %42 : vector<8x1xi1> to vector<8x1xi32>
    %44 = arith.sitofp %43 : vector<8x1xi32> to vector<8x1xf32>
    %45 = arith.mulf %33, %44 : vector<8x1xf32>
    %46 = vector.broadcast %45 : vector<8x1xf32> to vector<8x32xf32>
    %47 = arith.mulf %0, %46 : vector<8x32xf32>
    %48 = arith.mulf %3, %44 : vector<8x1xf32>
    %c1 = arith.constant 1 : index
    %c0_20 = arith.constant 0 : index
    %c0_21 = arith.constant 0 : index
    %49 = vector.load %arg3[%c1, %c0_20, %c0_21] : memref<2x32x2xf32, #tpu.memory_space<vmem>>, vector<1x32x2xf32>
    %50 = vector.shape_cast %49 : vector<1x32x2xf32> to vector<32x2xf32>
    %c1_22 = arith.constant 1 : index
    %c0_23 = arith.constant 0 : index
    %c0_24 = arith.constant 0 : index
    %51 = vector.load %arg4[%c1_22, %c0_23, %c0_24] : memref<2x1x1xf32, #tpu.memory_space<vmem>>, vector<1x1x1xf32>
    %52 = vector.shape_cast %51 : vector<1x1x1xf32> to vector<1x1xf32>
    %53 = arith.truncf %47 : vector<8x32xf32> to vector<8x32xbf16>
    %54 = arith.truncf %50 : vector<32x2xf32> to vector<32x2xbf16>
    %cst_25 = arith.constant dense<0.000000e+00> : vector<8x2xf32>
    %55 = tpu.matmul %53, %54, %cst_25 {dimension_numbers = #tpu.dot_dimension_numbers<[1], [0], [0], [1], [0, 0, 1, 1], [], []>} : vector<8x32xbf16>, vector<32x2xbf16>, vector<8x2xf32> -> vector<8x2xf32>
    %56 = arith.truncf %2 : vector<8x8xf32> to vector<8x8xbf16>
    %57 = vector.extract_strided_slice %55 {offsets = [0, 0], sizes = [8, 1], strides = [1, 1]} : vector<8x2xf32> to vector<8x1xf32>
    %58 = arith.truncf %57 : vector<8x1xf32> to vector<8x1xbf16>
    %cst_26 = arith.constant dense<0.000000e+00> : vector<8x1xf32>
    %59 = tpu.matmul %56, %58, %cst_26 {dimension_numbers = #tpu.dot_dimension_numbers<[1], [0], [0], [1], [0, 0, 1, 1], [], []>} : vector<8x8xbf16>, vector<8x1xbf16>, vector<8x1xf32> -> vector<8x1xf32>
    %60 = vector.extract_strided_slice %55 {offsets = [0, 1], sizes = [8, 1], strides = [1, 1]} : vector<8x2xf32> to vector<8x1xf32>
    %61 = arith.addf %59, %60 : vector<8x1xf32>
    %62 = vector.broadcast %52 : vector<1x1xf32> to vector<8x1xf32>
    %63 = arith.addf %61, %62 : vector<8x1xf32>
    %cst_27 = arith.constant 0.000000e+00 : f32
    %64 = vector.broadcast %cst_27 : f32 to vector<8x1xf32>
    %65 = arith.cmpf ogt, %48, %64 : vector<8x1xf32>
    %cst_28 = arith.constant -1.000000e+30 : f32
    %66 = vector.broadcast %cst_28 : f32 to vector<8x1xf32>
    %67 = arith.select %65, %63, %66 : vector<8x1xi1>, vector<8x1xf32>
    %cst_29 = arith.constant dense<0xFF800000> : vector<1xf32>
    %68 = vector.multi_reduction <maximumf>, %67, %cst_29 [0] : vector<8x1xf32> to vector<1xf32>
    %69 = vector.shape_cast %68 : vector<1xf32> to vector<1x1xf32>
    %70 = vector.broadcast %69 : vector<1x1xf32> to vector<8x1xf32>
    %71 = arith.subf %67, %70 : vector<8x1xf32>
    %72 = math.exp %71 : vector<8x1xf32>
    %cst_30 = arith.constant dense<0.000000e+00> : vector<1xf32>
    %73 = vector.multi_reduction <add>, %72, %cst_30 [0] : vector<8x1xf32> to vector<1xf32>
    %74 = vector.shape_cast %73 : vector<1xf32> to vector<1x1xf32>
    %cst_31 = arith.constant 1.000000e-30 : f32
    %75 = vector.broadcast %cst_31 : f32 to vector<1x1xf32>
    %76 = arith.maximumf %74, %75 : vector<1x1xf32>
    %77 = vector.broadcast %76 : vector<1x1xf32> to vector<8x1xf32>
    %78 = arith.divf %72, %77 : vector<8x1xf32>
    %cst_32 = arith.constant dense<0xFF800000> : vector<1xf32>
    %79 = vector.multi_reduction <maximumf>, %78, %cst_32 [0] : vector<8x1xf32> to vector<1xf32>
    %80 = vector.shape_cast %79 : vector<1xf32> to vector<1x1xf32>
    %cst_33 = arith.constant 1.000000e-07 : f32
    %81 = vector.broadcast %cst_33 : f32 to vector<1x1xf32>
    %82 = arith.subf %80, %81 : vector<1x1xf32>
    %cst_34 = arith.constant 5.000000e-01 : f32
    %83 = vector.broadcast %cst_34 : f32 to vector<1x1xf32>
    %84 = arith.minimumf %82, %83 : vector<1x1xf32>
    %85 = vector.broadcast %84 : vector<1x1xf32> to vector<8x1xf32>
    %86 = arith.cmpf ogt, %78, %85 : vector<8x1xf32>
    %87 = arith.andi %86, %65 : vector<8x1xi1>
    %88 = arith.extui %87 : vector<8x1xi1> to vector<8x1xi32>
    %89 = arith.sitofp %88 : vector<8x1xi32> to vector<8x1xf32>
    %90 = arith.mulf %78, %89 : vector<8x1xf32>
    %91 = vector.broadcast %90 : vector<8x1xf32> to vector<8x32xf32>
    %92 = arith.mulf %47, %91 : vector<8x32xf32>
    %93 = arith.mulf %48, %89 : vector<8x1xf32>
    %c0_35 = arith.constant 0 : index
    %c0_36 = arith.constant 0 : index
    %94 = vector.load %arg7[%c0_35, %c0_36] : memref<8x32xf32, #tpu.memory_space<vmem>>, vector<8x32xf32>
    tpu.vector_store %arg7[%c0_35, %c0_36], %92 {strides = array<i32>} : memref<8x32xf32, #tpu.memory_space<vmem>>, vector<8x32xf32>,
    %c0_37 = arith.constant 0 : index
    %c0_38 = arith.constant 0 : index
    %95 = vector.load %arg8[%c0_37, %c0_38] : memref<8x1xf32, #tpu.memory_space<vmem>>, vector<8x1xf32>
    tpu.vector_store %arg8[%c0_37, %c0_38], %93 {strides = array<i32>} : memref<8x1xf32, #tpu.memory_space<vmem>>, vector<8x1xf32>,
    %96 = arith.truncf %92 : vector<8x32xf32> to vector<8x32xbf16>
    %c0_39 = arith.constant 0 : index
    %c0_40 = arith.constant 0 : index
    %97 = vector.load %arg5[%c0_39, %c0_40] : memref<32x96xf32, #tpu.memory_space<vmem>>, vector<32x96xf32>
    %98 = arith.truncf %97 : vector<32x96xf32> to vector<32x96xbf16>
    %cst_41 = arith.constant dense<0.000000e+00> : vector<8x96xf32>
    %99 = tpu.matmul %96, %98, %cst_41 {dimension_numbers = #tpu.dot_dimension_numbers<[1], [0], [0], [1], [0, 0, 1, 1], [], []>} : vector<8x32xbf16>, vector<32x96xbf16>, vector<8x96xf32> -> vector<8x96xf32>
    %c0_42 = arith.constant 0 : index
    %c0_43 = arith.constant 0 : index
    %100 = vector.load %arg9[%c0_42, %c0_43] : memref<8x96xf32, #tpu.memory_space<vmem>>, vector<8x96xf32>
    tpu.vector_store %arg9[%c0_42, %c0_43], %99 {strides = array<i32>} : memref<8x96xf32, #tpu.memory_space<vmem>>, vector<8x96xf32>,
    %101 = arith.truncf %92 : vector<8x32xf32> to vector<8x32xbf16>
    %c0_44 = arith.constant 0 : index
    %c0_45 = arith.constant 0 : index
    %102 = vector.load %arg6[%c0_44, %c0_45] : memref<32x96xf32, #tpu.memory_space<vmem>>, vector<32x96xf32>
    %103 = arith.truncf %102 : vector<32x96xf32> to vector<32x96xbf16>
    %cst_46 = arith.constant dense<0.000000e+00> : vector<8x96xf32>
    %104 = tpu.matmul %101, %103, %cst_46 {dimension_numbers = #tpu.dot_dimension_numbers<[1], [0], [0], [1], [0, 0, 1, 1], [], []>} : vector<8x32xbf16>, vector<32x96xbf16>, vector<8x96xf32> -> vector<8x96xf32>
    %c0_47 = arith.constant 0 : index
    %c0_48 = arith.constant 0 : index
    %105 = vector.load %arg10[%c0_47, %c0_48] : memref<8x96xf32, #tpu.memory_space<vmem>>, vector<8x96xf32>
    tpu.vector_store %arg10[%c0_47, %c0_48], %104 {strides = array<i32>} : memref<8x96xf32, #tpu.memory_space<vmem>>, vector<8x96xf32>,
    return
  }
  func.func @transform_0(%arg0: i32) -> (i32, i32) {
    %c0_i32 = arith.constant 0 : i32
    %c0_i32_0 = arith.constant 0 : i32
    return %arg0, %c0_i32 : i32, i32
  }
  func.func @transform_1(%arg0: i32) -> (i32, i32, i32) {
    %c0_i32 = arith.constant 0 : i32
    %c0_i32_0 = arith.constant 0 : i32
    %c0_i32_1 = arith.constant 0 : i32
    return %arg0, %c0_i32, %c0_i32_0 : i32, i32, i32
  }
  func.func @transform_2(%arg0: i32) -> (i32, i32, i32) {
    %c0_i32 = arith.constant 0 : i32
    %c0_i32_0 = arith.constant 0 : i32
    %c0_i32_1 = arith.constant 0 : i32
    %c0_i32_2 = arith.constant 0 : i32
    return %c0_i32, %c0_i32_0, %c0_i32_1 : i32, i32, i32
  }
  func.func @transform_3(%arg0: i32) -> (i32, i32, i32) {
    %c0_i32 = arith.constant 0 : i32
    %c0_i32_0 = arith.constant 0 : i32
    %c0_i32_1 = arith.constant 0 : i32
    %c0_i32_2 = arith.constant 0 : i32
    return %c0_i32, %c0_i32_0, %c0_i32_1 : i32, i32, i32
  }
  func.func @transform_4(%arg0: i32) -> (i32, i32) {
    %c0_i32 = arith.constant 0 : i32
    %c0_i32_0 = arith.constant 0 : i32
    %c0_i32_1 = arith.constant 0 : i32
    return %c0_i32, %c0_i32_0 : i32, i32
  }
  func.func @transform_5(%arg0: i32) -> (i32, i32) {
    %c0_i32 = arith.constant 0 : i32
    %c0_i32_0 = arith.constant 0 : i32
    %c0_i32_1 = arith.constant 0 : i32
    return %c0_i32, %c0_i32_0 : i32, i32
  }
  func.func @transform_6(%arg0: i32) -> (i32, i32) {
    %c0_i32 = arith.constant 0 : i32
    %c0_i32_0 = arith.constant 0 : i32
    return %arg0, %c0_i32 : i32, i32
  }
  func.func @transform_7(%arg0: i32) -> (i32, i32) {
    %c0_i32 = arith.constant 0 : i32
    %c0_i32_0 = arith.constant 0 : i32
    return %arg0, %c0_i32 : i32, i32
  }
  func.func @transform_8(%arg0: i32) -> (i32, i32) {
    %c0_i32 = arith.constant 0 : i32
    %c0_i32_0 = arith.constant 0 : i32
    return %arg0, %c0_i32 : i32, i32
  }
  func.func @transform_9(%arg0: i32) -> (i32, i32) {
    %c0_i32 = arith.constant 0 : i32
    %c0_i32_0 = arith.constant 0 : i32
    return %arg0, %c0_i32 : i32, i32
  }
}

module attributes {stable_mosaic.version = 11 : i64} {
  func.func @edge_mlp_kernel(%arg0: i32, %arg1: i32, %arg2: memref<48xi32, #tpu.memory_space<smem>>, %arg3: memref<16x96xf32, #tpu.memory_space<vmem>>, %arg4: memref<16x1xf32, #tpu.memory_space<vmem>>, %arg5: memref<96x32xf32, #tpu.memory_space<vmem>>, %arg6: memref<1x32xf32, #tpu.memory_space<vmem>>, %arg7: memref<1x96xf32, #tpu.memory_space<vmem>>, %arg8: memref<1x96xf32, #tpu.memory_space<vmem>>, %arg9: memref<1x32xf32, #tpu.memory_space<vmem>>, %arg10: memref<1x32xf32, #tpu.memory_space<vmem>>, %arg11: memref<16x32xf32, #tpu.memory_space<vmem>>, %arg12: memref<1x96xf32, #tpu.memory_space<vmem>>, %arg13: memref<1x96xf32, #tpu.memory_space<vmem>>, %arg14: memref<1x32xf32, #tpu.memory_space<vmem>>, %arg15: memref<1x32xf32, #tpu.memory_space<vmem>>, %arg16: memref<1x1xf32, #tpu.memory_space<vmem>>, %arg17: memref<1x96xf32, #tpu.memory_space<vmem>>, %arg18: memref<1x96xf32, #tpu.memory_space<vmem>>, %arg19: memref<1x32xf32, #tpu.memory_space<vmem>>, %arg20: memref<1x32xf32, #tpu.memory_space<vmem>>, %arg21: memref<17x1x32xf32, #tpu.memory_space<vmem>>, %arg22: memref<16x1x32xf32, #tpu.memory_space<vmem>>) attributes {dimension_semantics = [#tpu.dimension_semantics<arbitrary>, #tpu.dimension_semantics<arbitrary>], iteration_bounds = array<i64: 3, 3>, scalar_prefetch = 1 : i64, scratch_operands = 11 : i64, tpu.core_type = #tpu.core_type<tc>, window_params = [{transform_indices = @transform_0, window_bounds = array<i64: 16, 96>}, {transform_indices = @transform_1, window_bounds = array<i64: 16, 1>}, {pipeline_mode = #tpu.pipeline_mode<synchronous>, transform_indices = @transform_2, window_bounds = array<i64: 96, 32>}, {pipeline_mode = #tpu.pipeline_mode<synchronous>, transform_indices = @transform_3, window_bounds = array<i64: 1, 32>}, {pipeline_mode = #tpu.pipeline_mode<synchronous>, transform_indices = @transform_4, window_bounds = array<i64: 1, 96>}, {pipeline_mode = #tpu.pipeline_mode<synchronous>, transform_indices = @transform_5, window_bounds = array<i64: 1, 96>}, {pipeline_mode = #tpu.pipeline_mode<synchronous>, transform_indices = @transform_6, window_bounds = array<i64: 1, 32>}, {pipeline_mode = #tpu.pipeline_mode<synchronous>, transform_indices = @transform_7, window_bounds = array<i64: 1, 32>}, {pipeline_mode = #tpu.pipeline_mode<synchronous>, transform_indices = @transform_8, window_bounds = array<i64: 16, 32>}]} {
    %c0_i32 = arith.constant 0 : i32
    %0 = arith.cmpi eq, %arg0, %c0_i32 : i32
    %c0_i32_0 = arith.constant 0 : i32
    %1 = arith.cmpi eq, %arg1, %c0_i32_0 : i32
    %2 = arith.andi %0, %1 : i1
    %3 = arith.extui %2 : i1 to i32
    %c0_i32_1 = arith.constant 0 : i32
    %4 = arith.cmpi ne, %3, %c0_i32_1 : i32
    scf.if %4 {
      %cst_18 = arith.constant 0.000000e+00 : f32
      %33 = vector.broadcast %cst_18 : f32 to vector<1x96xf32>
      %c0_19 = arith.constant 0 : index
      %c0_20 = arith.constant 0 : index
      %34 = vector.load %arg12[%c0_19, %c0_20] : memref<1x96xf32, #tpu.memory_space<vmem>>, vector<1x96xf32>
      tpu.vector_store %arg12[%c0_19, %c0_20], %33 {strides = array<i32>} : memref<1x96xf32, #tpu.memory_space<vmem>>, vector<1x96xf32>,
      %cst_21 = arith.constant 0.000000e+00 : f32
      %35 = vector.broadcast %cst_21 : f32 to vector<1x96xf32>
      %c0_22 = arith.constant 0 : index
      %c0_23 = arith.constant 0 : index
      %36 = vector.load %arg13[%c0_22, %c0_23] : memref<1x96xf32, #tpu.memory_space<vmem>>, vector<1x96xf32>
      tpu.vector_store %arg13[%c0_22, %c0_23], %35 {strides = array<i32>} : memref<1x96xf32, #tpu.memory_space<vmem>>, vector<1x96xf32>,
      %cst_24 = arith.constant 0.000000e+00 : f32
      %37 = vector.broadcast %cst_24 : f32 to vector<1x32xf32>
      %c0_25 = arith.constant 0 : index
      %c0_26 = arith.constant 0 : index
      %38 = vector.load %arg14[%c0_25, %c0_26] : memref<1x32xf32, #tpu.memory_space<vmem>>, vector<1x32xf32>
      tpu.vector_store %arg14[%c0_25, %c0_26], %37 {strides = array<i32>} : memref<1x32xf32, #tpu.memory_space<vmem>>, vector<1x32xf32>,
      %cst_27 = arith.constant 0.000000e+00 : f32
      %39 = vector.broadcast %cst_27 : f32 to vector<1x32xf32>
      %c0_28 = arith.constant 0 : index
      %c0_29 = arith.constant 0 : index
      %40 = vector.load %arg15[%c0_28, %c0_29] : memref<1x32xf32, #tpu.memory_space<vmem>>, vector<1x32xf32>
      tpu.vector_store %arg15[%c0_28, %c0_29], %39 {strides = array<i32>} : memref<1x32xf32, #tpu.memory_space<vmem>>, vector<1x32xf32>,
      %cst_30 = arith.constant 0.000000e+00 : f32
      %41 = vector.broadcast %cst_30 : f32 to vector<1x1xf32>
      %c0_31 = arith.constant 0 : index
      %c0_32 = arith.constant 0 : index
      %42 = vector.load %arg16[%c0_31, %c0_32] : memref<1x1xf32, #tpu.memory_space<vmem>>, vector<1x1xf32>
      tpu.vector_store %arg16[%c0_31, %c0_32], %41 {strides = array<i32>} : memref<1x1xf32, #tpu.memory_space<vmem>>, vector<1x1xf32>,
      %cst_33 = arith.constant -1.000000e+30 : f32
      %43 = vector.broadcast %cst_33 : f32 to vector<17x1x32xf32>
      %c0_34 = arith.constant 0 : index
      %c0_35 = arith.constant 0 : index
      %c0_36 = arith.constant 0 : index
      %44 = vector.load %arg21[%c0_34, %c0_35, %c0_36] : memref<17x1x32xf32, #tpu.memory_space<vmem>>, vector<17x1x32xf32>
      tpu.vector_store %arg21[%c0_34, %c0_35, %c0_36], %43 {strides = array<i32>} : memref<17x1x32xf32, #tpu.memory_space<vmem>>, vector<17x1x32xf32>,
    } else {
    }
    %c0 = arith.constant 0 : index
    %c0_2 = arith.constant 0 : index
    %5 = vector.load %arg4[%c0, %c0_2] : memref<16x1xf32, #tpu.memory_space<vmem>>, vector<16x1xf32>
    %c0_3 = arith.constant 0 : index
    %c0_4 = arith.constant 0 : index
    %6 = vector.load %arg3[%c0_3, %c0_4] : memref<16x96xf32, #tpu.memory_space<vmem>>, vector<16x96xf32>
    %cst = arith.constant 0.000000e+00 : f32
    %7 = vector.broadcast %cst : f32 to vector<16x96xf32>
    %8 = arith.maximumf %6, %7 : vector<16x96xf32>
    %c0_i32_5 = arith.constant 0 : i32
    %9 = arith.cmpi eq, %arg0, %c0_i32_5 : i32
    %10 = arith.extui %9 : i1 to i32
    %c0_i32_6 = arith.constant 0 : i32
    %11 = arith.cmpi ne, %10, %c0_i32_6 : i32
    scf.if %11 {
      %33 = vector.broadcast %5 : vector<16x1xf32> to vector<16x96xf32>
      %34 = arith.mulf %8, %33 : vector<16x96xf32>
      %c0_18 = arith.constant 0 : index
      %c0_19 = arith.constant 0 : index
      %35 = vector.load %arg12[%c0_18, %c0_19] : memref<1x96xf32, #tpu.memory_space<vmem>>, vector<1x96xf32>
      %cst_20 = arith.constant dense<0.000000e+00> : vector<96xf32>
      %36 = vector.multi_reduction <add>, %34, %cst_20 [0] : vector<16x96xf32> to vector<96xf32>
      %37 = vector.shape_cast %36 : vector<96xf32> to vector<1x96xf32>
      %38 = arith.addf %35, %37 : vector<1x96xf32>
      %c0_21 = arith.constant 0 : index
      %c0_22 = arith.constant 0 : index
      %39 = vector.load %arg12[%c0_21, %c0_22] : memref<1x96xf32, #tpu.memory_space<vmem>>, vector<1x96xf32>
      tpu.vector_store %arg12[%c0_21, %c0_22], %38 {strides = array<i32>} : memref<1x96xf32, #tpu.memory_space<vmem>>, vector<1x96xf32>,
      %c0_23 = arith.constant 0 : index
      %c0_24 = arith.constant 0 : index
      %40 = vector.load %arg13[%c0_23, %c0_24] : memref<1x96xf32, #tpu.memory_space<vmem>>, vector<1x96xf32>
      %41 = arith.mulf %8, %34 : vector<16x96xf32>
      %cst_25 = arith.constant dense<0.000000e+00> : vector<96xf32>
      %42 = vector.multi_reduction <add>, %41, %cst_25 [0] : vector<16x96xf32> to vector<96xf32>
      %43 = vector.shape_cast %42 : vector<96xf32> to vector<1x96xf32>
      %44 = arith.addf %40, %43 : vector<1x96xf32>
      %c0_26 = arith.constant 0 : index
      %c0_27 = arith.constant 0 : index
      %45 = vector.load %arg13[%c0_26, %c0_27] : memref<1x96xf32, #tpu.memory_space<vmem>>, vector<1x96xf32>
      tpu.vector_store %arg13[%c0_26, %c0_27], %44 {strides = array<i32>} : memref<1x96xf32, #tpu.memory_space<vmem>>, vector<1x96xf32>,
      %c0_28 = arith.constant 0 : index
      %c0_29 = arith.constant 0 : index
      %46 = vector.load %arg16[%c0_28, %c0_29] : memref<1x1xf32, #tpu.memory_space<vmem>>, vector<1x1xf32>
      %cst_30 = arith.constant dense<0.000000e+00> : vector<1xf32>
      %47 = vector.multi_reduction <add>, %5, %cst_30 [0] : vector<16x1xf32> to vector<1xf32>
      %48 = vector.shape_cast %47 : vector<1xf32> to vector<1x1xf32>
      %49 = arith.addf %46, %48 : vector<1x1xf32>
      %c0_31 = arith.constant 0 : index
      %c0_32 = arith.constant 0 : index
      %50 = vector.load %arg16[%c0_31, %c0_32] : memref<1x1xf32, #tpu.memory_space<vmem>>, vector<1x1xf32>
      tpu.vector_store %arg16[%c0_31, %c0_32], %49 {strides = array<i32>} : memref<1x1xf32, #tpu.memory_space<vmem>>, vector<1x1xf32>,
    } else {
    }
    %c0_i32_7 = arith.constant 0 : i32
    %12 = arith.cmpi eq, %arg0, %c0_i32_7 : i32
    %c2_i32 = arith.constant 2 : i32
    %13 = arith.cmpi eq, %arg1, %c2_i32 : i32
    %14 = arith.andi %12, %13 : i1
    %15 = arith.extui %14 : i1 to i32
    %c0_i32_8 = arith.constant 0 : i32
    %16 = arith.cmpi ne, %15, %c0_i32_8 : i32
    scf.if %16 {
      %c0_18 = arith.constant 0 : index
      %c0_19 = arith.constant 0 : index
      %33 = vector.load %arg16[%c0_18, %c0_19] : memref<1x1xf32, #tpu.memory_space<vmem>>, vector<1x1xf32>
      %cst_20 = arith.constant 1.000000e+00 : f32
      %34 = vector.broadcast %cst_20 : f32 to vector<1x1xf32>
      %35 = arith.maximumf %33, %34 : vector<1x1xf32>
      %cst_21 = arith.constant 1.000000e+00 : f32
      %36 = vector.broadcast %cst_21 : f32 to vector<1x1xf32>
      %37 = arith.divf %36, %35 : vector<1x1xf32>
      %c0_22 = arith.constant 0 : index
      %c0_23 = arith.constant 0 : index
      %38 = vector.load %arg12[%c0_22, %c0_23] : memref<1x96xf32, #tpu.memory_space<vmem>>, vector<1x96xf32>
      %39 = vector.broadcast %37 : vector<1x1xf32> to vector<1x96xf32>
      %40 = arith.mulf %38, %39 : vector<1x96xf32>
      %c0_24 = arith.constant 0 : index
      %c0_25 = arith.constant 0 : index
      %41 = vector.load %arg13[%c0_24, %c0_25] : memref<1x96xf32, #tpu.memory_space<vmem>>, vector<1x96xf32>
      %42 = vector.broadcast %37 : vector<1x1xf32> to vector<1x96xf32>
      %43 = arith.mulf %41, %42 : vector<1x96xf32>
      %44 = arith.mulf %40, %40 : vector<1x96xf32>
      %45 = arith.subf %43, %44 : vector<1x96xf32>
      %cst_26 = arith.constant 0.000000e+00 : f32
      %46 = vector.broadcast %cst_26 : f32 to vector<1x96xf32>
      %47 = arith.maximumf %45, %46 : vector<1x96xf32>
      %c0_27 = arith.constant 0 : index
      %c0_28 = arith.constant 0 : index
      %48 = vector.load %arg7[%c0_27, %c0_28] : memref<1x96xf32, #tpu.memory_space<vmem>>, vector<1x96xf32>
      %cst_29 = arith.constant 9.99999974E-6 : f32
      %49 = vector.broadcast %cst_29 : f32 to vector<1x96xf32>
      %50 = arith.addf %47, %49 : vector<1x96xf32>
      %51 = math.rsqrt %50 : vector<1x96xf32>
      %52 = arith.mulf %48, %51 : vector<1x96xf32>
      %c0_30 = arith.constant 0 : index
      %c0_31 = arith.constant 0 : index
      %53 = vector.load %arg17[%c0_30, %c0_31] : memref<1x96xf32, #tpu.memory_space<vmem>>, vector<1x96xf32>
      tpu.vector_store %arg17[%c0_30, %c0_31], %52 {strides = array<i32>} : memref<1x96xf32, #tpu.memory_space<vmem>>, vector<1x96xf32>,
      %c0_32 = arith.constant 0 : index
      %c0_33 = arith.constant 0 : index
      %54 = vector.load %arg8[%c0_32, %c0_33] : memref<1x96xf32, #tpu.memory_space<vmem>>, vector<1x96xf32>
      %55 = arith.mulf %40, %52 : vector<1x96xf32>
      %56 = arith.subf %54, %55 : vector<1x96xf32>
      %c0_34 = arith.constant 0 : index
      %c0_35 = arith.constant 0 : index
      %57 = vector.load %arg18[%c0_34, %c0_35] : memref<1x96xf32, #tpu.memory_space<vmem>>, vector<1x96xf32>
      tpu.vector_store %arg18[%c0_34, %c0_35], %56 {strides = array<i32>} : memref<1x96xf32, #tpu.memory_space<vmem>>, vector<1x96xf32>,
    } else {
    }
    %c1_i32 = arith.constant 1 : i32
    %17 = arith.cmpi eq, %arg0, %c1_i32 : i32
    %18 = arith.extui %17 : i1 to i32
    %c0_i32_9 = arith.constant 0 : i32
    %19 = arith.cmpi ne, %18, %c0_i32_9 : i32
    scf.if %19 {
      %c0_18 = arith.constant 0 : index
      %c0_19 = arith.constant 0 : index
      %33 = vector.load %arg17[%c0_18, %c0_19] : memref<1x96xf32, #tpu.memory_space<vmem>>, vector<1x96xf32>
      %34 = vector.broadcast %33 : vector<1x96xf32> to vector<16x96xf32>
      %35 = arith.mulf %8, %34 : vector<16x96xf32>
      %c0_20 = arith.constant 0 : index
      %c0_21 = arith.constant 0 : index
      %36 = vector.load %arg18[%c0_20, %c0_21] : memref<1x96xf32, #tpu.memory_space<vmem>>, vector<1x96xf32>
      %37 = vector.broadcast %36 : vector<1x96xf32> to vector<16x96xf32>
      %38 = arith.addf %35, %37 : vector<16x96xf32>
      %39 = arith.truncf %38 : vector<16x96xf32> to vector<16x96xbf16>
      %c0_22 = arith.constant 0 : index
      %c0_23 = arith.constant 0 : index
      %40 = vector.load %arg5[%c0_22, %c0_23] : memref<96x32xf32, #tpu.memory_space<vmem>>, vector<96x32xf32>
      %41 = arith.truncf %40 : vector<96x32xf32> to vector<96x32xbf16>
      %cst_24 = arith.constant dense<0.000000e+00> : vector<16x32xf32>
      %42 = tpu.matmul %39, %41, %cst_24 {dimension_numbers = #tpu.dot_dimension_numbers<[1], [0], [0], [1], [0, 0, 1, 1], [], []>} : vector<16x96xbf16>, vector<96x32xbf16>, vector<16x32xf32> -> vector<16x32xf32>
      %c0_25 = arith.constant 0 : index
      %c0_26 = arith.constant 0 : index
      %43 = vector.load %arg6[%c0_25, %c0_26] : memref<1x32xf32, #tpu.memory_space<vmem>>, vector<1x32xf32>
      %44 = vector.broadcast %43 : vector<1x32xf32> to vector<16x32xf32>
      %45 = arith.addf %42, %44 : vector<16x32xf32>
      %cst_27 = arith.constant 0.000000e+00 : f32
      %46 = vector.broadcast %cst_27 : f32 to vector<16x32xf32>
      %47 = arith.maximumf %45, %46 : vector<16x32xf32>
      %48 = vector.broadcast %5 : vector<16x1xf32> to vector<16x32xf32>
      %49 = arith.mulf %47, %48 : vector<16x32xf32>
      %c0_28 = arith.constant 0 : index
      %c0_29 = arith.constant 0 : index
      %50 = vector.load %arg14[%c0_28, %c0_29] : memref<1x32xf32, #tpu.memory_space<vmem>>, vector<1x32xf32>
      %cst_30 = arith.constant dense<0.000000e+00> : vector<32xf32>
      %51 = vector.multi_reduction <add>, %49, %cst_30 [0] : vector<16x32xf32> to vector<32xf32>
      %52 = vector.shape_cast %51 : vector<32xf32> to vector<1x32xf32>
      %53 = arith.addf %50, %52 : vector<1x32xf32>
      %c0_31 = arith.constant 0 : index
      %c0_32 = arith.constant 0 : index
      %54 = vector.load %arg14[%c0_31, %c0_32] : memref<1x32xf32, #tpu.memory_space<vmem>>, vector<1x32xf32>
      tpu.vector_store %arg14[%c0_31, %c0_32], %53 {strides = array<i32>} : memref<1x32xf32, #tpu.memory_space<vmem>>, vector<1x32xf32>,
      %c0_33 = arith.constant 0 : index
      %c0_34 = arith.constant 0 : index
      %55 = vector.load %arg15[%c0_33, %c0_34] : memref<1x32xf32, #tpu.memory_space<vmem>>, vector<1x32xf32>
      %56 = arith.mulf %47, %49 : vector<16x32xf32>
      %cst_35 = arith.constant dense<0.000000e+00> : vector<32xf32>
      %57 = vector.multi_reduction <add>, %56, %cst_35 [0] : vector<16x32xf32> to vector<32xf32>
      %58 = vector.shape_cast %57 : vector<32xf32> to vector<1x32xf32>
      %59 = arith.addf %55, %58 : vector<1x32xf32>
      %c0_36 = arith.constant 0 : index
      %c0_37 = arith.constant 0 : index
      %60 = vector.load %arg15[%c0_36, %c0_37] : memref<1x32xf32, #tpu.memory_space<vmem>>, vector<1x32xf32>
      tpu.vector_store %arg15[%c0_36, %c0_37], %59 {strides = array<i32>} : memref<1x32xf32, #tpu.memory_space<vmem>>, vector<1x32xf32>,
    } else {
    }
    %c1_i32_10 = arith.constant 1 : i32
    %20 = arith.cmpi eq, %arg0, %c1_i32_10 : i32
    %c2_i32_11 = arith.constant 2 : i32
    %21 = arith.cmpi eq, %arg1, %c2_i32_11 : i32
    %22 = arith.andi %20, %21 : i1
    %23 = arith.extui %22 : i1 to i32
    %c0_i32_12 = arith.constant 0 : i32
    %24 = arith.cmpi ne, %23, %c0_i32_12 : i32
    scf.if %24 {
      %c0_18 = arith.constant 0 : index
      %c0_19 = arith.constant 0 : index
      %33 = vector.load %arg16[%c0_18, %c0_19] : memref<1x1xf32, #tpu.memory_space<vmem>>, vector<1x1xf32>
      %cst_20 = arith.constant 1.000000e+00 : f32
      %34 = vector.broadcast %cst_20 : f32 to vector<1x1xf32>
      %35 = arith.maximumf %33, %34 : vector<1x1xf32>
      %cst_21 = arith.constant 1.000000e+00 : f32
      %36 = vector.broadcast %cst_21 : f32 to vector<1x1xf32>
      %37 = arith.divf %36, %35 : vector<1x1xf32>
      %c0_22 = arith.constant 0 : index
      %c0_23 = arith.constant 0 : index
      %38 = vector.load %arg14[%c0_22, %c0_23] : memref<1x32xf32, #tpu.memory_space<vmem>>, vector<1x32xf32>
      %39 = vector.broadcast %37 : vector<1x1xf32> to vector<1x32xf32>
      %40 = arith.mulf %38, %39 : vector<1x32xf32>
      %c0_24 = arith.constant 0 : index
      %c0_25 = arith.constant 0 : index
      %41 = vector.load %arg15[%c0_24, %c0_25] : memref<1x32xf32, #tpu.memory_space<vmem>>, vector<1x32xf32>
      %42 = vector.broadcast %37 : vector<1x1xf32> to vector<1x32xf32>
      %43 = arith.mulf %41, %42 : vector<1x32xf32>
      %44 = arith.mulf %40, %40 : vector<1x32xf32>
      %45 = arith.subf %43, %44 : vector<1x32xf32>
      %cst_26 = arith.constant 0.000000e+00 : f32
      %46 = vector.broadcast %cst_26 : f32 to vector<1x32xf32>
      %47 = arith.maximumf %45, %46 : vector<1x32xf32>
      %c0_27 = arith.constant 0 : index
      %c0_28 = arith.constant 0 : index
      %48 = vector.load %arg9[%c0_27, %c0_28] : memref<1x32xf32, #tpu.memory_space<vmem>>, vector<1x32xf32>
      %cst_29 = arith.constant 9.99999974E-6 : f32
      %49 = vector.broadcast %cst_29 : f32 to vector<1x32xf32>
      %50 = arith.addf %47, %49 : vector<1x32xf32>
      %51 = math.rsqrt %50 : vector<1x32xf32>
      %52 = arith.mulf %48, %51 : vector<1x32xf32>
      %c0_30 = arith.constant 0 : index
      %c0_31 = arith.constant 0 : index
      %53 = vector.load %arg19[%c0_30, %c0_31] : memref<1x32xf32, #tpu.memory_space<vmem>>, vector<1x32xf32>
      tpu.vector_store %arg19[%c0_30, %c0_31], %52 {strides = array<i32>} : memref<1x32xf32, #tpu.memory_space<vmem>>, vector<1x32xf32>,
      %c0_32 = arith.constant 0 : index
      %c0_33 = arith.constant 0 : index
      %54 = vector.load %arg10[%c0_32, %c0_33] : memref<1x32xf32, #tpu.memory_space<vmem>>, vector<1x32xf32>
      %55 = arith.mulf %40, %52 : vector<1x32xf32>
      %56 = arith.subf %54, %55 : vector<1x32xf32>
      %c0_34 = arith.constant 0 : index
      %c0_35 = arith.constant 0 : index
      %57 = vector.load %arg20[%c0_34, %c0_35] : memref<1x32xf32, #tpu.memory_space<vmem>>, vector<1x32xf32>
      tpu.vector_store %arg20[%c0_34, %c0_35], %56 {strides = array<i32>} : memref<1x32xf32, #tpu.memory_space<vmem>>, vector<1x32xf32>,
    } else {
    }
    %c2_i32_13 = arith.constant 2 : i32
    %25 = arith.cmpi eq, %arg0, %c2_i32_13 : i32
    %26 = arith.extui %25 : i1 to i32
    %c0_i32_14 = arith.constant 0 : i32
    %27 = arith.cmpi ne, %26, %c0_i32_14 : i32
    scf.if %27 {
      %c0_18 = arith.constant 0 : index
      %c0_19 = arith.constant 0 : index
      %33 = vector.load %arg17[%c0_18, %c0_19] : memref<1x96xf32, #tpu.memory_space<vmem>>, vector<1x96xf32>
      %34 = vector.broadcast %33 : vector<1x96xf32> to vector<16x96xf32>
      %35 = arith.mulf %8, %34 : vector<16x96xf32>
      %c0_20 = arith.constant 0 : index
      %c0_21 = arith.constant 0 : index
      %36 = vector.load %arg18[%c0_20, %c0_21] : memref<1x96xf32, #tpu.memory_space<vmem>>, vector<1x96xf32>
      %37 = vector.broadcast %36 : vector<1x96xf32> to vector<16x96xf32>
      %38 = arith.addf %35, %37 : vector<16x96xf32>
      %39 = arith.truncf %38 : vector<16x96xf32> to vector<16x96xbf16>
      %c0_22 = arith.constant 0 : index
      %c0_23 = arith.constant 0 : index
      %40 = vector.load %arg5[%c0_22, %c0_23] : memref<96x32xf32, #tpu.memory_space<vmem>>, vector<96x32xf32>
      %41 = arith.truncf %40 : vector<96x32xf32> to vector<96x32xbf16>
      %cst_24 = arith.constant dense<0.000000e+00> : vector<16x32xf32>
      %42 = tpu.matmul %39, %41, %cst_24 {dimension_numbers = #tpu.dot_dimension_numbers<[1], [0], [0], [1], [0, 0, 1, 1], [], []>} : vector<16x96xbf16>, vector<96x32xbf16>, vector<16x32xf32> -> vector<16x32xf32>
      %c0_25 = arith.constant 0 : index
      %c0_26 = arith.constant 0 : index
      %43 = vector.load %arg6[%c0_25, %c0_26] : memref<1x32xf32, #tpu.memory_space<vmem>>, vector<1x32xf32>
      %44 = vector.broadcast %43 : vector<1x32xf32> to vector<16x32xf32>
      %45 = arith.addf %42, %44 : vector<16x32xf32>
      %cst_27 = arith.constant 0.000000e+00 : f32
      %46 = vector.broadcast %cst_27 : f32 to vector<16x32xf32>
      %47 = arith.maximumf %45, %46 : vector<16x32xf32>
      %c0_28 = arith.constant 0 : index
      %c0_29 = arith.constant 0 : index
      %48 = vector.load %arg19[%c0_28, %c0_29] : memref<1x32xf32, #tpu.memory_space<vmem>>, vector<1x32xf32>
      %49 = vector.broadcast %48 : vector<1x32xf32> to vector<16x32xf32>
      %50 = arith.mulf %47, %49 : vector<16x32xf32>
      %c0_30 = arith.constant 0 : index
      %c0_31 = arith.constant 0 : index
      %51 = vector.load %arg20[%c0_30, %c0_31] : memref<1x32xf32, #tpu.memory_space<vmem>>, vector<1x32xf32>
      %52 = vector.broadcast %51 : vector<1x32xf32> to vector<16x32xf32>
      %53 = arith.addf %50, %52 : vector<16x32xf32>
      %54 = vector.shape_cast %53 : vector<16x32xf32> to vector<16x1x32xf32>
      %c0_32 = arith.constant 0 : index
      %c0_33 = arith.constant 0 : index
      %c0_34 = arith.constant 0 : index
      %55 = vector.load %arg22[%c0_32, %c0_33, %c0_34] : memref<16x1x32xf32, #tpu.memory_space<vmem>>, vector<16x1x32xf32>
      tpu.vector_store %arg22[%c0_32, %c0_33, %c0_34], %54 {strides = array<i32>} : memref<16x1x32xf32, #tpu.memory_space<vmem>>, vector<16x1x32xf32>,
      %c16_i32 = arith.constant 16 : i32
      %56 = arith.muli %arg1, %c16_i32 : i32
      %c0_i32_35 = arith.constant 0 : i32
      %c16_i32_36 = arith.constant 16 : i32
      %57 = arith.addi %c0_i32_35, %c16_i32_36 : i32
      %c1_i32_37 = arith.constant 1 : i32
      scf.for %arg23 = %c0_i32_35 to %57 step %c1_i32_37  : i32 {
        %c1_i32_39 = arith.constant 1 : i32
        %58 = arith.muli %arg23, %c1_i32_39 : i32
        %c0_i32_40 = arith.constant 0 : i32
        %59 = arith.addi %c0_i32_40, %58 : i32
        %60 = arith.addi %56, %59 : i32
        %61 = arith.index_cast %60 : i32 to index
        %62 = memref.load %arg2[%61] : memref<48xi32, #tpu.memory_space<smem>>
        %63 = arith.index_cast %62 : i32 to index
        %c0_41 = arith.constant 0 : index
        %c0_42 = arith.constant 0 : index
        %64 = vector.load %arg21[%63, %c0_41, %c0_42] : memref<17x1x32xf32, #tpu.memory_space<vmem>>, vector<1x1x32xf32>
        %65 = vector.shape_cast %64 : vector<1x1x32xf32> to vector<1x32xf32>
        %66 = arith.index_cast %59 : i32 to index
        %c0_43 = arith.constant 0 : index
        %c0_44 = arith.constant 0 : index
        %67 = vector.load %arg22[%66, %c0_43, %c0_44] : memref<16x1x32xf32, #tpu.memory_space<vmem>>, vector<1x1x32xf32>
        %68 = vector.shape_cast %67 : vector<1x1x32xf32> to vector<1x32xf32>
        %69 = arith.maximumf %65, %68 : vector<1x32xf32>
        %70 = arith.index_cast %62 : i32 to index
        %c0_45 = arith.constant 0 : index
        %c0_46 = arith.constant 0 : index
        %71 = vector.load %arg21[%70, %c0_45, %c0_46] : memref<17x1x32xf32, #tpu.memory_space<vmem>>, vector<1x1x32xf32>
        %72 = vector.shape_cast %71 : vector<1x1x32xf32> to vector<1x32xf32>
        %73 = vector.shape_cast %69 : vector<1x32xf32> to vector<1x1x32xf32>
        tpu.vector_store %arg21[%70, %c0_45, %c0_46], %73 {strides = array<i32>} : memref<17x1x32xf32, #tpu.memory_space<vmem>>, vector<1x1x32xf32>,
      }
      %c16_i32_38 = arith.constant 16 : i32
    } else {
    }
    %c2_i32_15 = arith.constant 2 : i32
    %28 = arith.cmpi eq, %arg0, %c2_i32_15 : i32
    %c2_i32_16 = arith.constant 2 : i32
    %29 = arith.cmpi eq, %arg1, %c2_i32_16 : i32
    %30 = arith.andi %28, %29 : i1
    %31 = arith.extui %30 : i1 to i32
    %c0_i32_17 = arith.constant 0 : i32
    %32 = arith.cmpi ne, %31, %c0_i32_17 : i32
    scf.if %32 {
      %c0_18 = arith.constant 0 : index
      %c0_19 = arith.constant 0 : index
      %c0_20 = arith.constant 0 : index
      %33 = vector.load %arg21[%c0_18, %c0_19, %c0_20] : memref<17x1x32xf32, #tpu.memory_space<vmem>>, vector<17x1x32xf32>
      %34 = vector.extract_strided_slice %33 {offsets = [0, 0, 0], sizes = [16, 1, 32], strides = [1, 1, 1]} : vector<17x1x32xf32> to vector<16x1x32xf32>
      %35 = vector.shape_cast %34 : vector<16x1x32xf32> to vector<16x32xf32>
      %c0_21 = arith.constant 0 : index
      %c0_22 = arith.constant 0 : index
      %36 = vector.load %arg11[%c0_21, %c0_22] : memref<16x32xf32, #tpu.memory_space<vmem>>, vector<16x32xf32>
      tpu.vector_store %arg11[%c0_21, %c0_22], %35 {strides = array<i32>} : memref<16x32xf32, #tpu.memory_space<vmem>>, vector<16x32xf32>,
    } else {
    }
    return
  }
  func.func @transform_0(%arg0: i32, %arg1: i32, %arg2: memref<48xi32, #tpu.memory_space<smem>>) -> (i32, i32) {
    %c0_i32 = arith.constant 0 : i32
    %c0_i32_0 = arith.constant 0 : i32
    return %arg1, %c0_i32 : i32, i32
  }
  func.func @transform_1(%arg0: i32, %arg1: i32, %arg2: memref<48xi32, #tpu.memory_space<smem>>) -> (i32, i32) {
    %c0_i32 = arith.constant 0 : i32
    %c0_i32_0 = arith.constant 0 : i32
    return %arg1, %c0_i32 : i32, i32
  }
  func.func @transform_2(%arg0: i32, %arg1: i32, %arg2: memref<48xi32, #tpu.memory_space<smem>>) -> (i32, i32) {
    %c0_i32 = arith.constant 0 : i32
    %c0_i32_0 = arith.constant 0 : i32
    %c0_i32_1 = arith.constant 0 : i32
    return %c0_i32, %c0_i32_0 : i32, i32
  }
  func.func @transform_3(%arg0: i32, %arg1: i32, %arg2: memref<48xi32, #tpu.memory_space<smem>>) -> (i32, i32) {
    %c0_i32 = arith.constant 0 : i32
    %c0_i32_0 = arith.constant 0 : i32
    %c0_i32_1 = arith.constant 0 : i32
    return %c0_i32, %c0_i32_0 : i32, i32
  }
  func.func @transform_4(%arg0: i32, %arg1: i32, %arg2: memref<48xi32, #tpu.memory_space<smem>>) -> (i32, i32) {
    %c0_i32 = arith.constant 0 : i32
    %c0_i32_0 = arith.constant 0 : i32
    %c0_i32_1 = arith.constant 0 : i32
    return %c0_i32, %c0_i32_0 : i32, i32
  }
  func.func @transform_5(%arg0: i32, %arg1: i32, %arg2: memref<48xi32, #tpu.memory_space<smem>>) -> (i32, i32) {
    %c0_i32 = arith.constant 0 : i32
    %c0_i32_0 = arith.constant 0 : i32
    %c0_i32_1 = arith.constant 0 : i32
    return %c0_i32, %c0_i32_0 : i32, i32
  }
  func.func @transform_6(%arg0: i32, %arg1: i32, %arg2: memref<48xi32, #tpu.memory_space<smem>>) -> (i32, i32) {
    %c0_i32 = arith.constant 0 : i32
    %c0_i32_0 = arith.constant 0 : i32
    %c0_i32_1 = arith.constant 0 : i32
    return %c0_i32, %c0_i32_0 : i32, i32
  }
  func.func @transform_7(%arg0: i32, %arg1: i32, %arg2: memref<48xi32, #tpu.memory_space<smem>>) -> (i32, i32) {
    %c0_i32 = arith.constant 0 : i32
    %c0_i32_0 = arith.constant 0 : i32
    %c0_i32_1 = arith.constant 0 : i32
    return %c0_i32, %c0_i32_0 : i32, i32
  }
  func.func @transform_8(%arg0: i32, %arg1: i32, %arg2: memref<48xi32, #tpu.memory_space<smem>>) -> (i32, i32) {
    %c0_i32 = arith.constant 0 : i32
    %c0_i32_0 = arith.constant 0 : i32
    %c0_i32_1 = arith.constant 0 : i32
    return %c0_i32, %c0_i32_0 : i32, i32
  }
}

</mosaic_0001>

<llo_original>
// kernel: obj_graph_forward.2
$region0: #{obj_graph_forward.2}
  #allocation0 [shape = 'u32[]', space=smem, size = 0x4, offset = 0x4, fixed_abs, tag = 'smem constant byte address 0x4 - core index']
  #allocation1 [shape = 'u32[144,128]{1,0:T(1,128)}', space=vmem, size = 0x12000, scoped, tag = 'internal scratch']
  %s0 = inlined_call_operand.vmem [shape: f32[16,32], index: 0, kind: input, shape index: {}]
  %s1 = inlined_call_operand.hbm [shape: f32[2,8,8], index: 1, kind: input, shape index: {}]
  %s2 = inlined_call_operand.vmem [shape: f32[2,32,2], index: 2, kind: input, shape index: {}]
  %s3 = inlined_call_operand.vmem [shape: f32[2,1,1], index: 3, kind: input, shape index: {}]
  %s4 = inlined_call_operand.vmem [shape: f32[32,96], index: 4, kind: input, shape index: {}]
  %s5 = inlined_call_operand.vmem [shape: f32[32,96], index: 5, kind: input, shape index: {}]
  %s6 = inlined_call_operand.vmem [shape: f32[16,32], index: 6, kind: output, shape index: {0}]
  %s7 = inlined_call_operand.vmem [shape: f32[16,1], index: 7, kind: output, shape index: {1}]
  %s8 = inlined_call_operand.vmem [shape: f32[16,96], index: 8, kind: output, shape index: {2}]
  %s9 = inlined_call_operand.vmem [shape: f32[16,96], index: 9, kind: output, shape index: {3}]
  %10 = xla_tuple %s6, %s7, %s8, %s9
  %s11 = sld [smem:[#allocation0]]
  $region85: #{obj_graph_forward.2} parent=0
    _
  %s13 = ssub.s32 1, %s11
  %s14 = scalar_select 0, %s13, %s11
  $region1: #{obj_graph_forward.2} parent=0
    #allocation2 [shape = 'u8[8192]{0}', space=vmem, size = 0x2000, scoped, tag = 'input window, operand 1']
    #allocation3 [shape = 's32[2]{0}', space=sflag, size = 0x8, scoped, tag = 'scoped memory for obj_graph_forward.2']
    %15 = vsyncpa [#allocation3], 0
    %s16 = scalar_lea.sflag [#allocation3], 1
    %17 = vsyncpa %s16, 0
    loop: start=0, step=1, limit=4
    $region2: #{obj_graph_forward.2} parent=1 // loop_pre_header
      _
    $region3: #{obj_graph_forward.2} parent=1 // loop_header
      %s19 = sphi 0, %s23
      %p20 = scmp.ge.s32.totalorder %s19, 4
      %s29 = sphi 0, %s31
      %s32 = sphi 0, %s29
      %s33 = sphi 0, %s32
      %s49 = sphi 0, %s33
      %s55 = sphi 0, %s57
      %s58 = sphi 0, %s55
      %s59 = sphi 0, %s58
      %s75 = sphi 0, %s59
      %s79 = sphi 0, %s79
      %s81 = sphi 0, %s79
      %s82 = sphi 0, %s81
      %s96 = sphi 0, %s82
      %s100 = sphi 0, %s100
      %s102 = sphi 0, %s100
      %s103 = sphi 0, %s102
      %s117 = sphi 0, %s103
      %s121 = sphi 0, %s121
      %s123 = sphi 0, %s121
      %s124 = sphi 0, %s123
      %s138 = sphi 0, %s124
      %s142 = sphi 0, %s142
      %s144 = sphi 0, %s142
      %s145 = sphi 0, %s144
      %s159 = sphi 0, %s145
      %s165 = sphi 0, %s167
      %s168 = sphi 0, %s165
      %s169 = sphi 0, %s168
      %s185 = sphi 0, %s169
      %s191 = sphi 0, %s193
      %s194 = sphi 0, %s191
      %s195 = sphi 0, %s194
      %s211 = sphi 0, %s195
      %s217 = sphi 0, %s219
      %s220 = sphi 0, %s217
      %s221 = sphi 0, %s220
      %s237 = sphi 0, %s221
      %s243 = sphi 0, %s245
      %s246 = sphi 0, %s243
      %s247 = sphi 0, %s246
      %s263 = sphi 0, %s247
    $region4: #{obj_graph_forward.2} parent=1 // loop_header_branch
      %22 = sbr.rel (%p20) target = $region8
    $region5: #{obj_graph_forward.2} parent=1 // loop_body
      %s24 = ssub.s32 %s19, 1
      %s25 = ssub.s32 %s19, 2
      %s26 = sadd.s32 %s19, 1
      %s27 = ssub.s32 %s19, %s26
      %p28 = scmp.eq.s32.totalorder %s27, 0
      %s30 = sadd.s32 %s29, 1
      %s31 = scalar_select %p28, %s29, %s30
      %p34 = pneg %p28
      %p35 = scmp.eq.s32.totalorder %s19, 1
      %p36 = por %p34, %p35
      %p37 = scmp.ne.s32.totalorder %s29, %s32
      %p38 = scmp.eq.s32.totalorder %s19, 0
      %p39 = por %p37, %p38
      %p40 = scmp.ne.s32.totalorder %s29, %s32
      %p41 = scmp.eq.s32.totalorder %s24, 1
      %p42 = por %p40, %p41
      %p43 = scmp.ne.s32.totalorder %s32, %s33
      %p44 = scmp.eq.s32.totalorder %s24, 0
      %p45 = por %p43, %p44
      %p46 = scmp.ne.s32.totalorder %s32, %s33
      %p47 = scmp.eq.s32.totalorder %s25, 1
      %p48 = por %p46, %p47
      %p50 = scmp.ne.s32.totalorder %s33, %s49
      %p51 = scmp.eq.s32.totalorder %s25, 0
      %p52 = por %p50, %p51
      %s53 = ssub.s32 %s19, %s26
      %p54 = scmp.eq.s32.totalorder %s53, 0
      %s56 = sadd.s32 %s55, 1
      %s57 = scalar_select %p54, %s55, %s56
      %p60 = pneg %p54
      %p61 = scmp.eq.s32.totalorder %s19, 1
      %p62 = por %p60, %p61
      %p63 = scmp.ne.s32.totalorder %s55, %s58
      %p64 = scmp.eq.s32.totalorder %s19, 0
      %p65 = por %p63, %p64
      %p66 = scmp.ne.s32.totalorder %s55, %s58
      %p67 = scmp.eq.s32.totalorder %s24, 1
      %p68 = por %p66, %p67
      %p69 = scmp.ne.s32.totalorder %s58, %s59
      %p70 = scmp.eq.s32.totalorder %s24, 0
      %p71 = por %p69, %p70
      %p72 = scmp.ne.s32.totalorder %s58, %s59
      %p73 = scmp.eq.s32.totalorder %s25, 1
      %p74 = por %p72, %p73
      %p76 = scmp.ne.s32.totalorder %s59, %s75
      %p77 = scmp.eq.s32.totalorder %s25, 0
      %p78 = por %p76, %p77
      %s80 = sadd.s32 %s79, 1
      %p83 = scmp.eq.s32.totalorder %s19, 1
      %p84 = scmp.ne.s32.totalorder %s79, %s81
      %p85 = scmp.eq.s32.totalorder %s19, 0
      %p86 = por %p84, %p85
      %p87 = scmp.ne.s32.totalorder %s79, %s81
      %p88 = scmp.eq.s32.totalorder %s24, 1
      %p89 = por %p87, %p88
      %p90 = scmp.ne.s32.totalorder %s81, %s82
      %p91 = scmp.eq.s32.totalorder %s24, 0
      %p92 = por %p90, %p91
      %p93 = scmp.ne.s32.totalorder %s81, %s82
      %p94 = scmp.eq.s32.totalorder %s25, 1
      %p95 = por %p93, %p94
      %p97 = scmp.ne.s32.totalorder %s82, %s96
      %p98 = scmp.eq.s32.totalorder %s25, 0
      %p99 = por %p97, %p98
      %s101 = sadd.s32 %s100, 1
      %p104 = scmp.eq.s32.totalorder %s19, 1
      %p105 = scmp.ne.s32.totalorder %s100, %s102
      %p106 = scmp.eq.s32.totalorder %s19, 0
      %p107 = por %p105, %p106
      %p108 = scmp.ne.s32.totalorder %s100, %s102
      %p109 = scmp.eq.s32.totalorder %s24, 1
      %p110 = por %p108, %p109
      %p111 = scmp.ne.s32.totalorder %s102, %s103
      %p112 = scmp.eq.s32.totalorder %s24, 0
      %p113 = por %p111, %p112
      %p114 = scmp.ne.s32.totalorder %s102, %s103
      %p115 = scmp.eq.s32.totalorder %s25, 1
      %p116 = por %p114, %p115
      %p118 = scmp.ne.s32.totalorder %s103, %s117
      %p119 = scmp.eq.s32.totalorder %s25, 0
      %p120 = por %p118, %p119
      %s122 = sadd.s32 %s121, 1
      %p125 = scmp.eq.s32.totalorder %s19, 1
      %p126 = scmp.ne.s32.totalorder %s121, %s123
      %p127 = scmp.eq.s32.totalorder %s19, 0
      %p128 = por %p126, %p127
      %p129 = scmp.ne.s32.totalorder %s121, %s123
      %p130 = scmp.eq.s32.totalorder %s24, 1
      %p131 = por %p129, %p130
      %p132 = scmp.ne.s32.totalorder %s123, %s124
      %p133 = scmp.eq.s32.totalorder %s24, 0
      %p134 = por %p132, %p133
      %p135 = scmp.ne.s32.totalorder %s123, %s124
      %p136 = scmp.eq.s32.totalorder %s25, 1
      %p137 = por %p135, %p136
      %p139 = scmp.ne.s32.totalorder %s124, %s138
      %p140 = scmp.eq.s32.totalorder %s25, 0
      %p141 = por %p139, %p140
      %s143 = sadd.s32 %s142, 1
      %p146 = scmp.eq.s32.totalorder %s19, 1
      %p147 = scmp.ne.s32.totalorder %s142, %s144
      %p148 = scmp.eq.s32.totalorder %s19, 0
      %p149 = por %p147, %p148
      %p150 = scmp.ne.s32.totalorder %s142, %s144
      %p151 = scmp.eq.s32.totalorder %s24, 1
      %p152 = por %p150, %p151
      %p153 = scmp.ne.s32.totalorder %s144, %s145
      %p154 = scmp.eq.s32.totalorder %s24, 0
      %p155 = por %p153, %p154
      %p156 = scmp.ne.s32.totalorder %s144, %s145
      %p157 = scmp.eq.s32.totalorder %s25, 1
      %p158 = por %p156, %p157
      %p160 = scmp.ne.s32.totalorder %s145, %s159
      %p161 = scmp.eq.s32.totalorder %s25, 0
      %p162 = por %p160, %p161
      %s163 = ssub.s32 %s19, %s26
      %p164 = scmp.eq.s32.totalorder %s163, 0
      %s166 = sadd.s32 %s165, 1
      %s167 = scalar_select %p164, %s165, %s166
      %p170 = pneg %p164
      %p171 = scmp.eq.s32.totalorder %s19, 1
      %p172 = por %p170, %p171
      %p173 = scmp.ne.s32.totalorder %s165, %s168
      %p174 = scmp.eq.s32.totalorder %s19, 0
      %p175 = por %p173, %p174
      %p176 = scmp.ne.s32.totalorder %s165, %s168
      %p177 = scmp.eq.s32.totalorder %s24, 1
      %p178 = por %p176, %p177
      %p179 = scmp.ne.s32.totalorder %s168, %s169
      %p180 = scmp.eq.s32.totalorder %s24, 0
      %p181 = por %p179, %p180
      %p182 = scmp.ne.s32.totalorder %s168, %s169
      %p183 = scmp.eq.s32.totalorder %s25, 1
      %p184 = por %p182, %p183
      %p186 = scmp.ne.s32.totalorder %s169, %s185
      %p187 = scmp.eq.s32.totalorder %s25, 0
      %p188 = por %p186, %p187
      %s189 = ssub.s32 %s19, %s26
      %p190 = scmp.eq.s32.totalorder %s189, 0
      %s192 = sadd.s32 %s191, 1
      %s193 = scalar_select %p190, %s191, %s192
      %p196 = pneg %p190
      %p197 = scmp.eq.s32.totalorder %s19, 1
      %p198 = por %p196, %p197
      %p199 = scmp.ne.s32.totalorder %s191, %s194
      %p200 = scmp.eq.s32.totalorder %s19, 0
      %p201 = por %p199, %p200
      %p202 = scmp.ne.s32.totalorder %s191, %s194
      %p203 = scmp.eq.s32.totalorder %s24, 1
      %p204 = por %p202, %p203
      %p205 = scmp.ne.s32.totalorder %s194, %s195
      %p206 = scmp.eq.s32.totalorder %s24, 0
      %p207 = por %p205, %p206
      %p208 = scmp.ne.s32.totalorder %s194, %s195
      %p209 = scmp.eq.s32.totalorder %s25, 1
      %p210 = por %p208, %p209
      %p212 = scmp.ne.s32.totalorder %s195, %s211
      %p213 = scmp.eq.s32.totalorder %s25, 0
      %p214 = por %p212, %p213
      %s215 = ssub.s32 %s19, %s26
      %p216 = scmp.eq.s32.totalorder %s215, 0
      %s218 = sadd.s32 %s217, 1
      %s219 = scalar_select %p216, %s217, %s218
      %p222 = pneg %p216
      %p223 = scmp.eq.s32.totalorder %s19, 1
      %p224 = por %p222, %p223
      %p225 = scmp.ne.s32.totalorder %s217, %s220
      %p226 = scmp.eq.s32.totalorder %s19, 0
      %p227 = por %p225, %p226
      %p228 = scmp.ne.s32.totalorder %s217, %s220
      %p229 = scmp.eq.s32.totalorder %s24, 1
      %p230 = por %p228, %p229
      %p231 = scmp.ne.s32.totalorder %s220, %s221
      %p232 = scmp.eq.s32.totalorder %s24, 0
      %p233 = por %p231, %p232
      %p234 = scmp.ne.s32.totalorder %s220, %s221
      %p235 = scmp.eq.s32.totalorder %s25, 1
      %p236 = por %p234, %p235
      %p238 = scmp.ne.s32.totalorder %s221, %s237
      %p239 = scmp.eq.s32.totalorder %s25, 0
      %p240 = por %p238, %p239
      %s241 = ssub.s32 %s19, %s26
      %p242 = scmp.eq.s32.totalorder %s241, 0
      %s244 = sadd.s32 %s243, 1
      %s245 = scalar_select %p242, %s243, %s244
      %p248 = pneg %p242
      %p249 = scmp.eq.s32.totalorder %s19, 1
      %p250 = por %p248, %p249
      %p251 = scmp.ne.s32.totalorder %s243, %s246
      %p252 = scmp.eq.s32.totalorder %s19, 0
      %p253 = por %p251, %p252
      %p254 = scmp.ne.s32.totalorder %s243, %s246
      %p255 = scmp.eq.s32.totalorder %s24, 1
      %p256 = por %p254, %p255
      %p257 = scmp.ne.s32.totalorder %s246, %s247
      %p258 = scmp.eq.s32.totalorder %s24, 0
      %p259 = por %p257, %p258
      %p260 = scmp.ne.s32.totalorder %s246, %s247
      %p261 = scmp.eq.s32.totalorder %s25, 1
      %p262 = por %p260, %p261
      %p264 = scmp.ne.s32.totalorder %s247, %s263
      %p265 = scmp.eq.s32.totalorder %s25, 0
      %p266 = por %p264, %p265
      %p267 = scmp.le.s32.totalorder 1, %s19
      %p268 = scmp.lt.s32.totalorder %s19, 3
      %p269 = pnand %p267, %p268
      %p270 = pneg %p269
      // Predicated region
      $region9: #{obj_graph_forward.2} parent=5 // pred_check
        _
      $region10: #{obj_graph_forward.2} parent=5 // pred_check_branch
        %272 = sbr.rel (%p269) target = $region12
      $region11: #{obj_graph_forward.2} parent=5 // pred_region
        %s273 = ssub.s32 %s19, 1
        // Predicated region
        $region13: #{obj_graph_forward.2} parent=11 // pred_check
          %p274 = pneg %p92
        $region14: #{obj_graph_forward.2} parent=11 // pred_check_branch
          %276 = sbr.rel (%p274) target = $region16
        $region15: #{obj_graph_forward.2} parent=11 // pred_region
          _
        $region16: #{obj_graph_forward.2} parent=11 // pred_fallthru
          _
        // Predicated region
        $region17: #{obj_graph_forward.2} parent=11 // pred_check
          %p277 = pneg %p113
        $region18: #{obj_graph_forward.2} parent=11 // pred_check_branch
          %279 = sbr.rel (%p277) target = $region20
        $region19: #{obj_graph_forward.2} parent=11 // pred_region
          _
        $region20: #{obj_graph_forward.2} parent=11 // pred_fallthru
          _
        // Predicated region
        $region21: #{obj_graph_forward.2} parent=11 // pred_check
          %p280 = pneg %p134
        $region22: #{obj_graph_forward.2} parent=11 // pred_check_branch
          %282 = sbr.rel (%p280) target = $region24
        $region23: #{obj_graph_forward.2} parent=11 // pred_region
          _
        $region24: #{obj_graph_forward.2} parent=11 // pred_fallthru
          _
        // Predicated region
        $region25: #{obj_graph_forward.2} parent=11 // pred_check
          %p283 = pneg %p155
        $region26: #{obj_graph_forward.2} parent=11 // pred_check_branch
          %285 = sbr.rel (%p283) target = $region28
        $region27: #{obj_graph_forward.2} parent=11 // pred_region
          _
        $region28: #{obj_graph_forward.2} parent=11 // pred_fallthru
          _
      $region12: #{obj_graph_forward.2} parent=5 // pred_fallthru
        _
      %p286 = scmp.lt.s32.totalorder %s19, 2
      // Predicated region
      $region29: #{obj_graph_forward.2} parent=5 // pred_check
        %p287 = pneg %p286
      $region30: #{obj_graph_forward.2} parent=5 // pred_check_branch
        %289 = sbr.rel (%p287) target = $region32
      $region31: #{obj_graph_forward.2} parent=5 // pred_region
        // Predicated region
        $region33: #{obj_graph_forward.2} parent=31 // pred_check
          %p290 = pneg %p39
        $region34: #{obj_graph_forward.2} parent=31 // pred_check_branch
          %292 = sbr.rel (%p290) target = $region36
        $region35: #{obj_graph_forward.2} parent=31 // pred_region
          %p293 = scmp.lt.s32.totalorder %s19, 1
          %s294 = scalar_select %p293, %s19, 1
          %s295 = smul.addr %s294, 8
          %s296 = scalar_lea.vmem %s0, %s295
        $region36: #{obj_graph_forward.2} parent=31 // pred_fallthru
          _
        // Predicated region
        $region37: #{obj_graph_forward.2} parent=31 // pred_check
          %p297 = pneg %p65
        $region38: #{obj_graph_forward.2} parent=31 // pred_check_branch
          %299 = sbr.rel (%p297) target = $region40
        $region39: #{obj_graph_forward.2} parent=31 // pred_region
          %s300 = sand.u32 %s55, 1
          %s301 = scalar_lea.sflag [#allocation3], %s300
          %s302 = sand.u32 %s55, 1
          %s303 = smul.addr %s302, 8
          %s304 = scalar_lea.vmem [#allocation2], %s303
          %s306 = ssub.s32 128, 128
          %307 = vsyncadd %s301, %s306
          %s308 = smul.addr %s19, 128
          %s309 = scalar_lea.hbm %s1, %s308
          %s311 = sshll.u32 %s304, 4
          %s312 = int_to_ptr.vmem [resolvable:$true] %s311
          %314 = dma.hbm_to_vmem [thread:$0]  %s309, 128, %s312, %s301
        $region40: #{obj_graph_forward.2} parent=31 // pred_fallthru
          _
      $region32: #{obj_graph_forward.2} parent=5 // pred_fallthru
        _
      %p315 = scmp.le.s32.totalorder 1, %s19
      %p316 = scmp.lt.s32.totalorder %s19, 3
      %p317 = pnand %p315, %p316
      %p318 = pneg %p317
      // Predicated region
      $region41: #{obj_graph_forward.2} parent=5 // pred_check
        _
      $region42: #{obj_graph_forward.2} parent=5 // pred_check_branch
        %320 = sbr.rel (%p317) target = $region44
      $region43: #{obj_graph_forward.2} parent=5 // pred_region
        %s321 = ssub.s32 %s19, 1
        %s322 = sand.u32 %s58, 1
        %s323 = scalar_lea.sflag [#allocation3], %s322
        %s324 = sand.u32 %s58, 1
        %s325 = smul.addr %s324, 8
        %s326 = scalar_lea.vmem [#allocation2], %s325
        // Predicated region
        $region45: #{obj_graph_forward.2} parent=43 // pred_check
          %p327 = pneg %p71
        $region46: #{obj_graph_forward.2} parent=43 // pred_check_branch
          %329 = sbr.rel (%p327) target = $region48
        $region47: #{obj_graph_forward.2} parent=43 // pred_region
          %330 = dma.done %s323, 128
        $region48: #{obj_graph_forward.2} parent=43 // pred_fallthru
          _
        %p331 = scmp.lt.s32.totalorder %s24, 1
        %s332 = scalar_select %p331, %s24, 1
        %s333 = smul.addr %s332, 8
        %s334 = scalar_lea.vmem %s0, %s333
        %p335 = pneg %p45
        %p336 = pneg %p42
        %s337 = sand.u32 %s58, 1
        %s338 = scalar_lea.sflag [#allocation3], %s337
        %s339 = sand.u32 %s58, 1
        %s340 = smul.addr %s339, 8
        %s341 = scalar_lea.vmem [#allocation2], %s340
        %p342 = pneg %p71
        %p343 = pneg %p68
        %p344 = pneg %p92
        %p345 = pneg %p89
        %p346 = pneg %p113
        %p347 = pneg %p110
        %p348 = pneg %p134
        %p349 = pneg %p131
        %p350 = pneg %p155
        %p351 = pneg %p152
        %p352 = pneg %p181
        %p353 = pneg %p178
        %p354 = scmp.lt.s32.totalorder %s24, 1
        %s355 = scalar_select %p354, %s24, 1
        %s356 = smul.addr %s355, 8
        %s357 = scalar_lea.vmem %s6, %s356
        %p358 = pneg %p207
        %p359 = pneg %p204
        %p360 = scmp.lt.s32.totalorder %s24, 1
        %s361 = scalar_select %p360, %s24, 1
        %s362 = smul.addr %s361, 8
        %s363 = scalar_lea.vmem %s7, %s362
        %p364 = pneg %p233
        %p365 = pneg %p230
        %p366 = scmp.lt.s32.totalorder %s24, 1
        %s367 = scalar_select %p366, %s24, 1
        %s368 = smul.addr %s367, 8
        %s369 = scalar_lea.vmem %s8, %s368
        %p370 = pneg %p259
        %p371 = pneg %p256
        %p372 = scmp.lt.s32.totalorder %s24, 1
        %s373 = scalar_select %p372, %s24, 1
        %s374 = smul.addr %s373, 8
        %s375 = scalar_lea.vmem %s9, %s374
        %p376 = scmp.lt.s32.totalorder %s24, 1
        %s377 = scalar_select %p376, %s24, 1
        %s378 = smul.addr %s377, 8
        %s379 = scalar_lea.vmem %s0, %s378
        %p380 = scmp.lt.s32.totalorder %s24, 1
        %s381 = scalar_select %p380, %s24, 1
        %s382 = smul.addr %s381, 8
        %s383 = scalar_lea.vmem %s6, %s382
        %p384 = scmp.lt.s32.totalorder %s24, 1
        %s385 = scalar_select %p384, %s24, 1
        %s386 = smul.addr %s385, 8
        %s387 = scalar_lea.vmem %s7, %s386
        %p388 = scmp.lt.s32.totalorder %s24, 1
        %s389 = scalar_select %p388, %s24, 1
        %s390 = smul.addr %s389, 8
        %s391 = scalar_lea.vmem %s8, %s390
        %p392 = scmp.lt.s32.totalorder %s24, 1
        %s393 = scalar_select %p392, %s24, 1
        %s394 = smul.addr %s393, 8
        %s395 = scalar_lea.vmem %s9, %s394
        %v397 = vld [vmem:[%s379] sm:$0xff]
        %v398 = vld [vmem:[%s326] sm:$0xff]
        %v399 = vld [vmem:[%s2] sm:$0xff]
        %v400 = vld [vmem:[%s2 + $0x8] sm:$0xff]
        %v401 = vld [vmem:[%s2 + $0x10] sm:$0xff]
        %v402 = vld [vmem:[%s2 + $0x18] sm:$0xff]
        %v403 = vld [vmem:[%s3] sm:$0x1]
        %v404 = vpack.c.bf16 %v397, %v397
        %v405 = vpack.c.bf16 %v400, %v399
        %v406 = vpack.c.bf16 %v402, %v401
        %vm407 = vcmask 261120
        %v409 = vsel %vm407, %v404, 0
        %411 = vmatprep.subr.bf16.mxu0 0
        %412 = vmatpush1.bf16.msra.mxu0 0
        %413 = vmatprep.subr.bf16.mxu0 0
        %414 = vmatpush1.bf16.msra.mxu0 0
        %415 = vmatprep.subr.bf16.mxu0 0
        %416 = vmatpush1.bf16.msra.mxu0 0
        %417 = vmatprep.subr.bf16.mxu0 0
        %418 = vmatpush1.bf16.msra.mxu0 0
        %419 = vmatprep.subr.bf16.mxu0 0
        %420 = vmatpush1.bf16.msra.mxu0 0
        %421 = vmatprep.subr.bf16.mxu0 0
        %422 = vmatpush1.bf16.msra.mxu0 0
        %423 = vmatprep.subr.bf16.mxu0 0
        %424 = vmatpush1.bf16.msra.mxu0 %v406
        %425 = vmatprep.subr.bf16.mxu0 0
        %426 = vmatpush1.bf16.msra.mxu0 %v405
        %427 = vmatprep.subr.bf16.mxu0 0
        %428 = vmatpush2.bf16.msra.mxu0 0
        %429 = vmatprep.subr.bf16.mxu0 0
        %430 = vmatpush2.bf16.msra.mxu0 0
        %431 = vmatprep.subr.bf16.mxu0 0
        %432 = vmatpush2.bf16.msra.mxu0 0
        %433 = vmatprep.subr.bf16.mxu0 0
        %434 = vmatpush2.bf16.msra.mxu0 0
        %435 = vmatprep.subr.bf16.mxu0 0
        %436 = vmatpush2.bf16.msra.mxu0 0
        %437 = vmatprep.subr.bf16.mxu0 0
        %438 = vmatpush2.bf16.msra.mxu0 0
        %439 = vmatprep.subr.bf16.mxu0 0
        %440 = vmatpush2.bf16.msra.mxu0 0
        %441 = vmatprep.subr.bf16.mxu0 0
        %442 = vmatpush2.bf16.msra.mxu0 0
        %443 = vmatprep.mubr.bf16.mxu0 0
        %444 = vmatmul.mubr.bf16.gmra.mxu0 %v409
        %v445 = vpop.f32.mrf.mxu0
        %v446 = vadd.f32 0.0, %v445
        %v447 = vpop.f32.mrf.mxu0
        %v448 = vpop.f32.mrf.mxu0
        %v449 = vpop.f32.mrf.mxu0
        %450 = vdwg.mxu0
        %v451 = vpack.c.bf16 %v398, %v398
        %v452 = vpack.c.bf16 %v446, %v446
        %454 = vrot.lane.b32.xlu0 %v446, 127
        %v455 = vpop.permute.xlu0 %454
        %vm457 = vcmask 64512
        %v459 = vsel %vm457, %v451, 0
        %vm461 = vcmask 1043456
        %v463 = vsel %vm461, %v452, 0
        %465 = vmatprep.subr.bf16.mxu0 0
        %466 = vmatpush1.bf16.msra.mxu0 0
        %467 = vmatprep.subr.bf16.mxu0 0
        %468 = vmatpush1.bf16.msra.mxu0 0
        %469 = vmatprep.subr.bf16.mxu0 0
        %470 = vmatpush1.bf16.msra.mxu0 0
        %471 = vmatprep.subr.bf16.mxu0 0
        %472 = vmatpush1.bf16.msra.mxu0 0
        %473 = vmatprep.subr.bf16.mxu0 0
        %474 = vmatpush1.bf16.msra.mxu0 0
        %475 = vmatprep.subr.bf16.mxu0 0
        %476 = vmatpush1.bf16.msra.mxu0 0
        %477 = vmatprep.subr.bf16.mxu0 0
        %478 = vmatpush1.bf16.msra.mxu0 0
        %479 = vmatprep.subr.bf16.mxu0 0
        %480 = vmatpush1.bf16.msra.mxu0 %v463
        %481 = vmatprep.subr.bf16.mxu0 0
        %482 = vmatpush2.bf16.msra.mxu0 0
        %483 = vmatprep.subr.bf16.mxu0 0
        %484 = vmatpush2.bf16.msra.mxu0 0
        %485 = vmatprep.subr.bf16.mxu0 0
        %486 = vmatpush2.bf16.msra.mxu0 0
        %487 = vmatprep.subr.bf16.mxu0 0
        %488 = vmatpush2.bf16.msra.mxu0 0
        %489 = vmatprep.subr.bf16.mxu0 0
        %490 = vmatpush2.bf16.msra.mxu0 0
        %491 = vmatprep.subr.bf16.mxu0 0
        %492 = vmatpush2.bf16.msra.mxu0 0
        %493 = vmatprep.subr.bf16.mxu0 0
        %494 = vmatpush2.bf16.msra.mxu0 0
        %495 = vmatprep.subr.bf16.mxu0 0
        %496 = vmatpush2.bf16.msra.mxu0 0
        %497 = vmatprep.mubr.bf16.mxu0 0
        %498 = vmatmul.mubr.bf16.gmra.mxu0 %v459
        %v499 = vpop.f32.mrf.mxu0
        %v500 = vadd.f32 %v455, %v499
        %v501 = vpop.f32.mrf.mxu0
        %v502 = vpop.f32.mrf.mxu0
        %v503 = vpop.f32.mrf.mxu0
        %504 = vdwg.mxu0
        %v506 = vlaneseq
        %v507 = vshrl.u32 %v506, 7
        %v508 = vsub.s32 0, %v507
        %v509 = vrot.slane %v403, %v508
        %v511 = vadd.f32 %v500, %v509
        %vm512 = vcmp.gt.f32.partialorder 1.0, 0.0
        %v513 = vsel %vm512, %v511, -1e+30
        %vm514 = vcmask 7168
        %v515 = vsel %vm514, %v513, -inf
        %v516 = vrot.slane %v515, 4
        %v517 = vmax.f32 %v515, %v516
        %v518 = vrot.slane %v517, 2
        %v519 = vmax.f32 %v517, %v518
        %v520 = vrot.slane %v519, 1
        %v521 = vmax.f32 %v519, %v520
        %v522 = vsub.f32 %v513, %v521
        %v523 = vmul.f32 %v522, 1.442695
        %v524 = vpow.pop %v523
        %v525 = vsel %vm514, %v524, 0.0
        %v526 = vrot.slane %v525, 4
        %v527 = vadd.f32 %v525, %v526
        %v528 = vrot.slane %v527, 2
        %v529 = vadd.f32 %v527, %v528
        %v530 = vrot.slane %v529, 1
        %v531 = vadd.f32 %v529, %v530
        %v532 = vmax.f32 %v531, 1e-30
        %v533 = vrcp.pop %v532
        %v534 = vmul.f32 %v524, %v533
        %v535 = vsel %vm514, %v534, -inf
        %v536 = vrot.slane %v535, 4
        %v537 = vmax.f32 %v535, %v536
        %v538 = vrot.slane %v537, 2
        %v539 = vmax.f32 %v537, %v538
        %v540 = vrot.slane %v539, 1
        %v541 = vmax.f32 %v539, %v540
        %v542 = vsub.f32 %v541, 1e-07
        %v543 = vmin.f32 %v542, 0.5
        %vm544 = vcmp.gt.f32.partialorder %v534, %v543
        %vm545 = vmand %vm544, %vm512
        %v546 = vsel %vm545, 1, 0
        %v547 = vcvt.s32.f32 %v546
        %v548 = vmul.f32 %v534, %v547
        %550 = vset.pattern.permute.xlu0 0
        %551 = vperm.xlu0 %550, %v548
        %v552 = vpop.permute.xlu0 %551
        %v554 = vmul.f32 %v397, %v552
        %s555 = scalar_lea.vmem %s2, 32
        %v556 = vld [vmem:[%s555] sm:$0xff]
        %v557 = vld [vmem:[%s555 + $0x8] sm:$0xff]
        %v558 = vld [vmem:[%s555 + $0x10] sm:$0xff]
        %v559 = vld [vmem:[%s555 + $0x18] sm:$0xff]
        %s560 = scalar_lea.vmem %s3, 1
        %v561 = vld [vmem:[%s560] sm:$0x1]
        %v562 = vpack.c.bf16 %v554, %v554
        %v563 = vpack.c.bf16 %v557, %v556
        %v564 = vpack.c.bf16 %v559, %v558
        %v566 = vsel %vm407, %v562, 0
        %568 = vmatprep.subr.bf16.mxu0 0
        %569 = vmatpush1.bf16.msra.mxu0 0
        %570 = vmatprep.subr.bf16.mxu0 0
        %571 = vmatpush1.bf16.msra.mxu0 0
        %572 = vmatprep.subr.bf16.mxu0 0
        %573 = vmatpush1.bf16.msra.mxu0 0
        %574 = vmatprep.subr.bf16.mxu0 0
        %575 = vmatpush1.bf16.msra.mxu0 0
        %576 = vmatprep.subr.bf16.mxu0 0
        %577 = vmatpush1.bf16.msra.mxu0 0
        %578 = vmatprep.subr.bf16.mxu0 0
        %579 = vmatpush1.bf16.msra.mxu0 0
        %580 = vmatprep.subr.bf16.mxu0 0
        %581 = vmatpush1.bf16.msra.mxu0 %v564
        %582 = vmatprep.subr.bf16.mxu0 0
        %583 = vmatpush1.bf16.msra.mxu0 %v563
        %584 = vmatprep.subr.bf16.mxu0 0
        %585 = vmatpush2.bf16.msra.mxu0 0
        %586 = vmatprep.subr.bf16.mxu0 0
        %587 = vmatpush2.bf16.msra.mxu0 0
        %588 = vmatprep.subr.bf16.mxu0 0
        %589 = vmatpush2.bf16.msra.mxu0 0
        %590 = vmatprep.subr.bf16.mxu0 0
        %591 = vmatpush2.bf16.msra.mxu0 0
        %592 = vmatprep.subr.bf16.mxu0 0
        %593 = vmatpush2.bf16.msra.mxu0 0
        %594 = vmatprep.subr.bf16.mxu0 0
        %595 = vmatpush2.bf16.msra.mxu0 0
        %596 = vmatprep.subr.bf16.mxu0 0
        %597 = vmatpush2.bf16.msra.mxu0 0
        %598 = vmatprep.subr.bf16.mxu0 0
        %599 = vmatpush2.bf16.msra.mxu0 0
        %600 = vmatprep.mubr.bf16.mxu0 0
        %601 = vmatmul.mubr.bf16.gmra.mxu0 %v566
        %v602 = vpop.f32.mrf.mxu0
        %v603 = vadd.f32 0.0, %v602
        %v604 = vpop.f32.mrf.mxu0
        %v605 = vpop.f32.mrf.mxu0
        %v606 = vpop.f32.mrf.mxu0
        %607 = vdwg.mxu0
        %v608 = vpack.c.bf16 %v603, %v603
        %610 = vrot.lane.b32.xlu0 %v603, 127
        %v611 = vpop.permute.xlu0 %610
        %v614 = vsel %vm461, %v608, 0
        %616 = vmatprep.subr.bf16.mxu0 0
        %617 = vmatpush1.bf16.msra.mxu0 0
        %618 = vmatprep.subr.bf16.mxu0 0
        %619 = vmatpush1.bf16.msra.mxu0 0
        %620 = vmatprep.subr.bf16.mxu0 0
        %621 = vmatpush1.bf16.msra.mxu0 0
        %622 = vmatprep.subr.bf16.mxu0 0
        %623 = vmatpush1.bf16.msra.mxu0 0
        %624 = vmatprep.subr.bf16.mxu0 0
        %625 = vmatpush1.bf16.msra.mxu0 0
        %626 = vmatprep.subr.bf16.mxu0 0
        %627 = vmatpush1.bf16.msra.mxu0 0
        %628 = vmatprep.subr.bf16.mxu0 0
        %629 = vmatpush1.bf16.msra.mxu0 0
        %630 = vmatprep.subr.bf16.mxu0 0
        %631 = vmatpush1.bf16.msra.mxu0 %v614
        %632 = vmatprep.subr.bf16.mxu0 0
        %633 = vmatpush2.bf16.msra.mxu0 0
        %634 = vmatprep.subr.bf16.mxu0 0
        %635 = vmatpush2.bf16.msra.mxu0 0
        %636 = vmatprep.subr.bf16.mxu0 0
        %637 = vmatpush2.bf16.msra.mxu0 0
        %638 = vmatprep.subr.bf16.mxu0 0
        %639 = vmatpush2.bf16.msra.mxu0 0
        %640 = vmatprep.subr.bf16.mxu0 0
        %641 = vmatpush2.bf16.msra.mxu0 0
        %642 = vmatprep.subr.bf16.mxu0 0
        %643 = vmatpush2.bf16.msra.mxu0 0
        %644 = vmatprep.subr.bf16.mxu0 0
        %645 = vmatpush2.bf16.msra.mxu0 0
        %646 = vmatprep.subr.bf16.mxu0 0
        %647 = vmatpush2.bf16.msra.mxu0 0
        %648 = vmatprep.mubr.bf16.mxu0 0
        %649 = vmatmul.mubr.bf16.gmra.mxu0 %v459
        %v650 = vpop.f32.mrf.mxu0
        %v651 = vadd.f32 %v611, %v650
        %v652 = vpop.f32.mrf.mxu0
        %v653 = vpop.f32.mrf.mxu0
        %v654 = vpop.f32.mrf.mxu0
        %655 = vdwg.mxu0
        %v657 = vlaneseq
        %v658 = vshrl.u32 %v657, 7
        %v659 = vsub.s32 0, %v658
        %v660 = vrot.slane %v561, %v659
        %v662 = vadd.f32 %v651, %v660
        %vm663 = vcmp.gt.f32.partialorder %v547, 0.0
        %v664 = vsel %vm663, %v662, -1e+30
        %v665 = vsel %vm514, %v664, -inf
        %v666 = vrot.slane %v665, 4
        %v667 = vmax.f32 %v665, %v666
        %v668 = vrot.slane %v667, 2
        %v669 = vmax.f32 %v667, %v668
        %v670 = vrot.slane %v669, 1
        %v671 = vmax.f32 %v669, %v670
        %v672 = vsub.f32 %v664, %v671
        %v673 = vmul.f32 %v672, 1.442695
        %v674 = vpow.pop %v673
        %v675 = vsel %vm514, %v674, 0.0
        %v676 = vrot.slane %v675, 4
        %v677 = vadd.f32 %v675, %v676
        %v678 = vrot.slane %v677, 2
        %v679 = vadd.f32 %v677, %v678
        %v680 = vrot.slane %v679, 1
        %v681 = vadd.f32 %v679, %v680
        %v682 = vmax.f32 %v681, 1e-30
        %v683 = vrcp.pop %v682
        %v684 = vmul.f32 %v674, %v683
        %v685 = vsel %vm514, %v684, -inf
        %v686 = vrot.slane %v685, 4
        %v687 = vmax.f32 %v685, %v686
        %v688 = vrot.slane %v687, 2
        %v689 = vmax.f32 %v687, %v688
        %v690 = vrot.slane %v689, 1
        %v691 = vmax.f32 %v689, %v690
        %v692 = vsub.f32 %v691, 1e-07
        %v693 = vmin.f32 %v692, 0.5
        %vm694 = vcmp.gt.f32.partialorder %v684, %v693
        %vm695 = vmand %vm694, %vm663
        %v696 = vsel %vm695, 1, 0
        %v697 = vcvt.s32.f32 %v696
        %v698 = vmul.f32 %v684, %v697
        %700 = vset.pattern.permute.xlu0 0
        %701 = vperm.xlu0 %700, %v698
        %v702 = vpop.permute.xlu0 %701
        %v704 = vmul.f32 %v554, %v702
        %v705 = vmul.f32 %v547, %v697
        %706 = vst.msk [vmem:[%s383] sm:$0xff] %vm407, %v704
        %707 = vst.msk [vmem:[%s387] sm:$0xff] %vm514, %v705
        %v708 = vpack.c.bf16 %v704, %v704
        %v709 = vld [vmem:[%s4] sm:$0xff]
        %v710 = vld [vmem:[%s4 + $0x8] sm:$0xff]
        %v711 = vld [vmem:[%s4 + $0x10] sm:$0xff]
        %v712 = vld [vmem:[%s4 + $0x18] sm:$0xff]
        %v713 = vpack.c.bf16 %v710, %v709
        %v714 = vpack.c.bf16 %v712, %v711
        %v716 = vsel %vm407, %v708, 0
        %718 = vmatprep.subr.bf16.mxu0 0
        %719 = vmatpush1.bf16.msra.mxu0 0
        %720 = vmatprep.subr.bf16.mxu0 0
        %721 = vmatpush1.bf16.msra.mxu0 0
        %722 = vmatprep.subr.bf16.mxu0 0
        %723 = vmatpush1.bf16.msra.mxu0 0
        %724 = vmatprep.subr.bf16.mxu0 0
        %725 = vmatpush1.bf16.msra.mxu0 0
        %726 = vmatprep.subr.bf16.mxu0 0
        %727 = vmatpush1.bf16.msra.mxu0 0
        %728 = vmatprep.subr.bf16.mxu0 0
        %729 = vmatpush1.bf16.msra.mxu0 0
        %730 = vmatprep.subr.bf16.mxu0 0
        %731 = vmatpush1.bf16.msra.mxu0 %v714
        %732 = vmatprep.subr.bf16.mxu0 0
        %733 = vmatpush1.bf16.msra.mxu0 %v713
        %734 = vmatprep.subr.bf16.mxu0 0
        %735 = vmatpush2.bf16.msra.mxu0 0
        %736 = vmatprep.subr.bf16.mxu0 0
        %737 = vmatpush2.bf16.msra.mxu0 0
        %738 = vmatprep.subr.bf16.mxu0 0
        %739 = vmatpush2.bf16.msra.mxu0 0
        %740 = vmatprep.subr.bf16.mxu0 0
        %741 = vmatpush2.bf16.msra.mxu0 0
        %742 = vmatprep.subr.bf16.mxu0 0
        %743 = vmatpush2.bf16.msra.mxu0 0
        %744 = vmatprep.subr.bf16.mxu0 0
        %745 = vmatpush2.bf16.msra.mxu0 0
        %746 = vmatprep.subr.bf16.mxu0 0
        %747 = vmatpush2.bf16.msra.mxu0 0
        %748 = vmatprep.subr.bf16.mxu0 0
        %749 = vmatpush2.bf16.msra.mxu0 0
        %750 = vmatprep.mubr.bf16.mxu0 0
        %751 = vmatmul.mubr.bf16.gmra.mxu0 %v716
        %v752 = vpop.f32.mrf.mxu0
        %v753 = vadd.f32 0.0, %v752
        %v754 = vpop.f32.mrf.mxu0
        %v755 = vpop.f32.mrf.mxu0
        %v756 = vpop.f32.mrf.mxu0
        %757 = vdwg.mxu0
        %vm758 = vcmask 785408
        %759 = vst.msk [vmem:[%s391] sm:$0xff] %vm758, %v753
        %v760 = vld [vmem:[%s5] sm:$0xff]
        %v761 = vld [vmem:[%s5 + $0x8] sm:$0xff]
        %v762 = vld [vmem:[%s5 + $0x10] sm:$0xff]
        %v763 = vld [vmem:[%s5 + $0x18] sm:$0xff]
        %v764 = vpack.c.bf16 %v761, %v760
        %v765 = vpack.c.bf16 %v763, %v762
        %766 = vmatprep.subr.bf16.mxu0 0
        %767 = vmatpush1.bf16.msra.mxu0 0
        %768 = vmatprep.subr.bf16.mxu0 0
        %769 = vmatpush1.bf16.msra.mxu0 0
        %770 = vmatprep.subr.bf16.mxu0 0
        %771 = vmatpush1.bf16.msra.mxu0 0
        %772 = vmatprep.subr.bf16.mxu0 0
        %773 = vmatpush1.bf16.msra.mxu0 0
        %774 = vmatprep.subr.bf16.mxu0 0
        %775 = vmatpush1.bf16.msra.mxu0 0
        %776 = vmatprep.subr.bf16.mxu0 0
        %777 = vmatpush1.bf16.msra.mxu0 0
        %778 = vmatprep.subr.bf16.mxu0 0
        %779 = vmatpush1.bf16.msra.mxu0 %v765
        %780 = vmatprep.subr.bf16.mxu0 0
        %781 = vmatpush1.bf16.msra.mxu0 %v764
        %782 = vmatprep.subr.bf16.mxu0 0
        %783 = vmatpush2.bf16.msra.mxu0 0
        %784 = vmatprep.subr.bf16.mxu0 0
        %785 = vmatpush2.bf16.msra.mxu0 0
        %786 = vmatprep.subr.bf16.mxu0 0
        %787 = vmatpush2.bf16.msra.mxu0 0
        %788 = vmatprep.subr.bf16.mxu0 0
        %789 = vmatpush2.bf16.msra.mxu0 0
        %790 = vmatprep.subr.bf16.mxu0 0
        %791 = vmatpush2.bf16.msra.mxu0 0
        %792 = vmatprep.subr.bf16.mxu0 0
        %793 = vmatpush2.bf16.msra.mxu0 0
        %794 = vmatprep.subr.bf16.mxu0 0
        %795 = vmatpush2.bf16.msra.mxu0 0
        %796 = vmatprep.subr.bf16.mxu0 0
        %797 = vmatpush2.bf16.msra.mxu0 0
        %798 = vmatprep.mubr.bf16.mxu0 0
        %799 = vmatmul.mubr.bf16.gmra.mxu0 %v716
        %v800 = vpop.f32.mrf.mxu0
        %v801 = vadd.f32 0.0, %v800
        %v802 = vpop.f32.mrf.mxu0
        %v803 = vpop.f32.mrf.mxu0
        %v804 = vpop.f32.mrf.mxu0
        %805 = vdwg.mxu0
        %806 = vst.msk [vmem:[%s395] sm:$0xff] %vm758, %v801
        %p807 = scmp.lt.s32.totalorder %s24, 1
        %s808 = scalar_select %p807, %s24, 1
        %s809 = smul.addr %s808, 8
        %s810 = scalar_lea.vmem %s6, %s809
        %p811 = scmp.lt.s32.totalorder %s24, 1
        %s812 = scalar_select %p811, %s24, 1
        %s813 = smul.addr %s812, 8
        %s814 = scalar_lea.vmem %s7, %s813
        %p815 = scmp.lt.s32.totalorder %s24, 1
        %s816 = scalar_select %p815, %s24, 1
        %s817 = smul.addr %s816, 8
        %s818 = scalar_lea.vmem %s8, %s817
        %p819 = scmp.lt.s32.totalorder %s24, 1
        %s820 = scalar_select %p819, %s24, 1
        %s821 = smul.addr %s820, 8
        %s822 = scalar_lea.vmem %s9, %s821
        // Predicated region
        $region49: #{obj_graph_forward.2} parent=43 // pred_check
          %p823 = pneg %p178
        $region50: #{obj_graph_forward.2} parent=43 // pred_check_branch
          %825 = sbr.rel (%p823) target = $region52
        $region51: #{obj_graph_forward.2} parent=43 // pred_region
          _
        $region52: #{obj_graph_forward.2} parent=43 // pred_fallthru
          _
        // Predicated region
        $region53: #{obj_graph_forward.2} parent=43 // pred_check
          %p826 = pneg %p204
        $region54: #{obj_graph_forward.2} parent=43 // pred_check_branch
          %828 = sbr.rel (%p826) target = $region56
        $region55: #{obj_graph_forward.2} parent=43 // pred_region
          _
        $region56: #{obj_graph_forward.2} parent=43 // pred_fallthru
          _
        // Predicated region
        $region57: #{obj_graph_forward.2} parent=43 // pred_check
          %p829 = pneg %p230
        $region58: #{obj_graph_forward.2} parent=43 // pred_check_branch
          %831 = sbr.rel (%p829) target = $region60
        $region59: #{obj_graph_forward.2} parent=43 // pred_region
          _
        $region60: #{obj_graph_forward.2} parent=43 // pred_fallthru
          _
        // Predicated region
        $region61: #{obj_graph_forward.2} parent=43 // pred_check
          %p832 = pneg %p256
        $region62: #{obj_graph_forward.2} parent=43 // pred_check_branch
          %834 = sbr.rel (%p832) target = $region64
        $region63: #{obj_graph_forward.2} parent=43 // pred_region
          _
        $region64: #{obj_graph_forward.2} parent=43 // pred_fallthru
          _
      $region44: #{obj_graph_forward.2} parent=5 // pred_fallthru
        _
      %p835 = scmp.le.s32.totalorder 2, %s19
      // Predicated region
      $region65: #{obj_graph_forward.2} parent=5 // pred_check
        %p836 = pneg %p835
      $region66: #{obj_graph_forward.2} parent=5 // pred_check_branch
        %838 = sbr.rel (%p836) target = $region68
      $region67: #{obj_graph_forward.2} parent=5 // pred_region
        %s839 = ssub.s32 %s19, 2
        // Predicated region
        $region69: #{obj_graph_forward.2} parent=67 // pred_check
          %p840 = pneg %p184
        $region70: #{obj_graph_forward.2} parent=67 // pred_check_branch
          %842 = sbr.rel (%p840) target = $region72
        $region71: #{obj_graph_forward.2} parent=67 // pred_region
          %p843 = scmp.lt.s32.totalorder %s25, 1
          %s844 = scalar_select %p843, %s25, 1
          %s845 = smul.addr %s844, 8
          %s846 = scalar_lea.vmem %s6, %s845
        $region72: #{obj_graph_forward.2} parent=67 // pred_fallthru
          _
        // Predicated region
        $region73: #{obj_graph_forward.2} parent=67 // pred_check
          %p847 = pneg %p210
        $region74: #{obj_graph_forward.2} parent=67 // pred_check_branch
          %849 = sbr.rel (%p847) target = $region76
        $region75: #{obj_graph_forward.2} parent=67 // pred_region
          %p850 = scmp.lt.s32.totalorder %s25, 1
          %s851 = scalar_select %p850, %s25, 1
          %s852 = smul.addr %s851, 8
          %s853 = scalar_lea.vmem %s7, %s852
        $region76: #{obj_graph_forward.2} parent=67 // pred_fallthru
          _
        // Predicated region
        $region77: #{obj_graph_forward.2} parent=67 // pred_check
          %p854 = pneg %p236
        $region78: #{obj_graph_forward.2} parent=67 // pred_check_branch
          %856 = sbr.rel (%p854) target = $region80
        $region79: #{obj_graph_forward.2} parent=67 // pred_region
          %p857 = scmp.lt.s32.totalorder %s25, 1
          %s858 = scalar_select %p857, %s25, 1
          %s859 = smul.addr %s858, 8
          %s860 = scalar_lea.vmem %s8, %s859
        $region80: #{obj_graph_forward.2} parent=67 // pred_fallthru
          _
        // Predicated region
        $region81: #{obj_graph_forward.2} parent=67 // pred_check
          %p861 = pneg %p262
        $region82: #{obj_graph_forward.2} parent=67 // pred_check_branch
          %863 = sbr.rel (%p861) target = $region84
        $region83: #{obj_graph_forward.2} parent=67 // pred_region
          %p864 = scmp.lt.s32.totalorder %s25, 1
          %s865 = scalar_select %p864, %s25, 1
          %s866 = smul.addr %s865, 8
          %s867 = scalar_lea.vmem %s9, %s866
        $region84: #{obj_graph_forward.2} parent=67 // pred_fallthru
          _
      $region68: #{obj_graph_forward.2} parent=5 // pred_fallthru
        _
    $region6: #{obj_graph_forward.2} parent=1 // loop_footer
      %s23 = sadd.s32 1, %s19
    $region7: #{obj_graph_forward.2} parent=1 // loop_footer_branch
      %18 = sbr.rel target = $region3
    $region8: #{obj_graph_forward.2} parent=1 // loop_exit
      _
    %868 = vsyncpa [#allocation3], 1
    %s869 = scalar_lea.sflag [#allocation3], 1
    %870 = vsyncpa %s869, 1

// kernel: obj_graph_forward.3
$region0: #{obj_graph_forward.3}
  #allocation0 [shape = 'u32[]', space=smem, size = 0x4, offset = 0x4, fixed_abs, tag = 'smem constant byte address 0x4 - core index']
  #allocation1 [shape = 'u32[144,128]{1,0:T(1,128)}', space=vmem, size = 0x12000, scoped, tag = 'internal scratch']
  #allocation2 [shape = 'f32[1,96]{1,0:T(1,128)}', space=vmem, size = 0x200, scoped, tag = 'scratch operand']
  #allocation3 [shape = 'f32[1,96]{1,0:T(1,128)}', space=vmem, size = 0x200, scoped, tag = 'scratch operand']
  #allocation4 [shape = 'f32[1,32]{1,0:T(1,128)}', space=vmem, size = 0x200, scoped, tag = 'scratch operand']
  #allocation5 [shape = 'f32[1,32]{1,0:T(1,128)}', space=vmem, size = 0x200, scoped, tag = 'scratch operand']
  #allocation6 [shape = 'f32[1,1]{1,0:T(1,128)}', space=vmem, size = 0x200, scoped, tag = 'scratch operand']
  #allocation7 [shape = 'f32[1,96]{1,0:T(1,128)}', space=vmem, size = 0x200, scoped, tag = 'scratch operand']
  #allocation8 [shape = 'f32[1,96]{1,0:T(1,128)}', space=vmem, size = 0x200, scoped, tag = 'scratch operand']
  #allocation9 [shape = 'f32[1,32]{1,0:T(1,128)}', space=vmem, size = 0x200, scoped, tag = 'scratch operand']
  #allocation10 [shape = 'f32[1,32]{1,0:T(1,128)}', space=vmem, size = 0x200, scoped, tag = 'scratch operand']
  #allocation11 [shape = 'f32[17,1,32]{2,1,0:T(1,128)}', space=vmem, size = 0x2200, scoped, tag = 'scratch operand']
  #allocation12 [shape = 'f32[16,1,32]{2,1,0:T(1,128)}', space=vmem, size = 0x2000, scoped, tag = 'scratch operand']
  #allocation13 [shape = 's32[1]{0}', space=sflag, size = 0x4, scoped, tag = 'scoped memory for obj_graph_forward.3']
  #allocation14 [shape = 'u8[512]{0}', space=smem, size = 0x200, scoped, tag = 'prefetched SMEM operand 0']
  %s0 = inlined_call_operand.vmem [shape: s32[48], index: 0, kind: input, shape index: {}]
  %s1 = inlined_call_operand.vmem [shape: f32[48,96], index: 1, kind: input, shape index: {}]
  %s2 = inlined_call_operand.vmem [shape: f32[48,1], index: 2, kind: input, shape index: {}]
  %s3 = inlined_call_operand.vmem [shape: f32[96,32], index: 3, kind: input, shape index: {}]
  %s4 = inlined_call_operand.vmem [shape: f32[1,32], index: 4, kind: input, shape index: {}]
  %s5 = inlined_call_operand.vmem [shape: f32[1,96], index: 5, kind: input, shape index: {}]
  %s6 = inlined_call_operand.vmem [shape: f32[1,96], index: 6, kind: input, shape index: {}]
  %s7 = inlined_call_operand.vmem [shape: f32[1,32], index: 7, kind: input, shape index: {}]
  %s8 = inlined_call_operand.vmem [shape: f32[1,32], index: 8, kind: input, shape index: {}]
  %s9 = inlined_call_operand.vmem [shape: f32[16,32], index: 9, kind: output, shape index: {}]
  %s10 = sld [smem:[#allocation0]]
  $region100: #{obj_graph_forward.3} parent=0
    _
  %s12 = ssub.s32 1, %s10
  %s13 = scalar_select 0, %s12, %s10
  %s14 = sshll.u32 %s0, 4
  %s15 = int_to_ptr.vmem [resolvable:$true] %s14
  %17 = dma.vmem_to_smem %s15, 16, [#allocation14], [#allocation13]
  %18 = dma.done [#allocation13], 16
  %19 = sfence
  loop: start=0, step=1, limit=11
  $region2: #{obj_graph_forward.3} parent=0 // loop_pre_header
    _
  $region3: #{obj_graph_forward.3} parent=0 // loop_header
    %s21 = sphi 0, %s25
    %p22 = scmp.ge.s32.totalorder %s21, 11
    %s28 = sphi 0, %s40
    %s29 = sphi 0, %s36
    %s30 = sphi 0, %s28
    %s31 = sphi 0, %s29
    %s32 = sphi 0, %s30
    %s33 = sphi 0, %s31
    %s43 = sphi 0, %s45
    %s46 = sphi 0, %s43
    %s47 = sphi 0, %s46
    %s63 = sphi 0, %s47
    %s69 = sphi 0, %s71
    %s72 = sphi 0, %s69
    %s73 = sphi 0, %s72
    %s89 = sphi 0, %s73
    %s93 = sphi 0, %s93
    %s95 = sphi 0, %s93
    %s96 = sphi 0, %s95
    %s110 = sphi 0, %s96
    %s114 = sphi 0, %s114
    %s116 = sphi 0, %s114
    %s117 = sphi 0, %s116
    %s131 = sphi 0, %s117
    %s135 = sphi 0, %s135
    %s137 = sphi 0, %s135
    %s138 = sphi 0, %s137
    %s152 = sphi 0, %s138
    %s156 = sphi 0, %s156
    %s158 = sphi 0, %s156
    %s159 = sphi 0, %s158
    %s173 = sphi 0, %s159
    %s177 = sphi 0, %s177
    %s179 = sphi 0, %s177
    %s180 = sphi 0, %s179
    %s194 = sphi 0, %s180
    %s198 = sphi 0, %s198
    %s200 = sphi 0, %s198
    %s201 = sphi 0, %s200
    %s215 = sphi 0, %s201
    %s219 = sphi 0, %s219
    %s221 = sphi 0, %s219
    %s222 = sphi 0, %s221
    %s236 = sphi 0, %s222
  $region4: #{obj_graph_forward.3} parent=0 // loop_header_branch
    %24 = sbr.rel (%p22) target = $region8
  $region5: #{obj_graph_forward.3} parent=0 // loop_body
    %s26 = ssub.s32 %s21, 1
    %s27 = ssub.s32 %s21, 2
    %s34 = sadd.s32 1, %s29
    %p35 = scmp.ge.s32.totalorder %s34, 3
    %s36 = scalar_select %p35, 0, %s34
    %s37 = sadd.s32 1, %s28
    %s38 = scalar_select %p35, %s37, %s28
    %p39 = scmp.ge.s32.totalorder %s38, 3
    %s40 = scalar_select %p39, 0, %s38
    %s41 = ssub.s32 %s29, %s36
    %p42 = scmp.eq.s32.totalorder %s41, 0
    %s44 = sadd.s32 %s43, 1
    %s45 = scalar_select %p42, %s43, %s44
    %p48 = pneg %p42
    %p49 = scmp.eq.s32.totalorder %s21, 8
    %p50 = por %p48, %p49
    %p51 = scmp.ne.s32.totalorder %s43, %s46
    %p52 = scmp.eq.s32.totalorder %s21, 0
    %p53 = por %p51, %p52
    %p54 = scmp.ne.s32.totalorder %s43, %s46
    %p55 = scmp.eq.s32.totalorder %s26, 8
    %p56 = por %p54, %p55
    %p57 = scmp.ne.s32.totalorder %s46, %s47
    %p58 = scmp.eq.s32.totalorder %s26, 0
    %p59 = por %p57, %p58
    %p60 = scmp.ne.s32.totalorder %s46, %s47
    %p61 = scmp.eq.s32.totalorder %s27, 8
    %p62 = por %p60, %p61
    %p64 = scmp.ne.s32.totalorder %s47, %s63
    %p65 = scmp.eq.s32.totalorder %s27, 0
    %p66 = por %p64, %p65
    %s67 = ssub.s32 %s29, %s36
    %p68 = scmp.eq.s32.totalorder %s67, 0
    %s70 = sadd.s32 %s69, 1
    %s71 = scalar_select %p68, %s69, %s70
    %p74 = pneg %p68
    %p75 = scmp.eq.s32.totalorder %s21, 8
    %p76 = por %p74, %p75
    %p77 = scmp.ne.s32.totalorder %s69, %s72
    %p78 = scmp.eq.s32.totalorder %s21, 0
    %p79 = por %p77, %p78
    %p80 = scmp.ne.s32.totalorder %s69, %s72
    %p81 = scmp.eq.s32.totalorder %s26, 8
    %p82 = por %p80, %p81
    %p83 = scmp.ne.s32.totalorder %s72, %s73
    %p84 = scmp.eq.s32.totalorder %s26, 0
    %p85 = por %p83, %p84
    %p86 = scmp.ne.s32.totalorder %s72, %s73
    %p87 = scmp.eq.s32.totalorder %s27, 8
    %p88 = por %p86, %p87
    %p90 = scmp.ne.s32.totalorder %s73, %s89
    %p91 = scmp.eq.s32.totalorder %s27, 0
    %p92 = por %p90, %p91
    %s94 = sadd.s32 %s93, 1
    %p97 = scmp.eq.s32.totalorder %s21, 8
    %p98 = scmp.ne.s32.totalorder %s93, %s95
    %p99 = scmp.eq.s32.totalorder %s21, 0
    %p100 = por %p98, %p99
    %p101 = scmp.ne.s32.totalorder %s93, %s95
    %p102 = scmp.eq.s32.totalorder %s26, 8
    %p103 = por %p101, %p102
    %p104 = scmp.ne.s32.totalorder %s95, %s96
    %p105 = scmp.eq.s32.totalorder %s26, 0
    %p106 = por %p104, %p105
    %p107 = scmp.ne.s32.totalorder %s95, %s96
    %p108 = scmp.eq.s32.totalorder %s27, 8
    %p109 = por %p107, %p108
    %p111 = scmp.ne.s32.totalorder %s96, %s110
    %p112 = scmp.eq.s32.totalorder %s27, 0
    %p113 = por %p111, %p112
    %s115 = sadd.s32 %s114, 1
    %p118 = scmp.eq.s32.totalorder %s21, 8
    %p119 = scmp.ne.s32.totalorder %s114, %s116
    %p120 = scmp.eq.s32.totalorder %s21, 0
    %p121 = por %p119, %p120
    %p122 = scmp.ne.s32.totalorder %s114, %s116
    %p123 = scmp.eq.s32.totalorder %s26, 8
    %p124 = por %p122, %p123
    %p125 = scmp.ne.s32.totalorder %s116, %s117
    %p126 = scmp.eq.s32.totalorder %s26, 0
    %p127 = por %p125, %p126
    %p128 = scmp.ne.s32.totalorder %s116, %s117
    %p129 = scmp.eq.s32.totalorder %s27, 8
    %p130 = por %p128, %p129
    %p132 = scmp.ne.s32.totalorder %s117, %s131
    %p133 = scmp.eq.s32.totalorder %s27, 0
    %p134 = por %p132, %p133
    %s136 = sadd.s32 %s135, 1
    %p139 = scmp.eq.s32.totalorder %s21, 8
    %p140 = scmp.ne.s32.totalorder %s135, %s137
    %p141 = scmp.eq.s32.totalorder %s21, 0
    %p142 = por %p140, %p141
    %p143 = scmp.ne.s32.totalorder %s135, %s137
    %p144 = scmp.eq.s32.totalorder %s26, 8
    %p145 = por %p143, %p144
    %p146 = scmp.ne.s32.totalorder %s137, %s138
    %p147 = scmp.eq.s32.totalorder %s26, 0
    %p148 = por %p146, %p147
    %p149 = scmp.ne.s32.totalorder %s137, %s138
    %p150 = scmp.eq.s32.totalorder %s27, 8
    %p151 = por %p149, %p150
    %p153 = scmp.ne.s32.totalorder %s138, %s152
    %p154 = scmp.eq.s32.totalorder %s27, 0
    %p155 = por %p153, %p154
    %s157 = sadd.s32 %s156, 1
    %p160 = scmp.eq.s32.totalorder %s21, 8
    %p161 = scmp.ne.s32.totalorder %s156, %s158
    %p162 = scmp.eq.s32.totalorder %s21, 0
    %p163 = por %p161, %p162
    %p164 = scmp.ne.s32.totalorder %s156, %s158
    %p165 = scmp.eq.s32.totalorder %s26, 8
    %p166 = por %p164, %p165
    %p167 = scmp.ne.s32.totalorder %s158, %s159
    %p168 = scmp.eq.s32.totalorder %s26, 0
    %p169 = por %p167, %p168
    %p170 = scmp.ne.s32.totalorder %s158, %s159
    %p171 = scmp.eq.s32.totalorder %s27, 8
    %p172 = por %p170, %p171
    %p174 = scmp.ne.s32.totalorder %s159, %s173
    %p175 = scmp.eq.s32.totalorder %s27, 0
    %p176 = por %p174, %p175
    %s178 = sadd.s32 %s177, 1
    %p181 = scmp.eq.s32.totalorder %s21, 8
    %p182 = scmp.ne.s32.totalorder %s177, %s179
    %p183 = scmp.eq.s32.totalorder %s21, 0
    %p184 = por %p182, %p183
    %p185 = scmp.ne.s32.totalorder %s177, %s179
    %p186 = scmp.eq.s32.totalorder %s26, 8
    %p187 = por %p185, %p186
    %p188 = scmp.ne.s32.totalorder %s179, %s180
    %p189 = scmp.eq.s32.totalorder %s26, 0
    %p190 = por %p188, %p189
    %p191 = scmp.ne.s32.totalorder %s179, %s180
    %p192 = scmp.eq.s32.totalorder %s27, 8
    %p193 = por %p191, %p192
    %p195 = scmp.ne.s32.totalorder %s180, %s194
    %p196 = scmp.eq.s32.totalorder %s27, 0
    %p197 = por %p195, %p196
    %s199 = sadd.s32 %s198, 1
    %p202 = scmp.eq.s32.totalorder %s21, 8
    %p203 = scmp.ne.s32.totalorder %s198, %s200
    %p204 = scmp.eq.s32.totalorder %s21, 0
    %p205 = por %p203, %p204
    %p206 = scmp.ne.s32.totalorder %s198, %s200
    %p207 = scmp.eq.s32.totalorder %s26, 8
    %p208 = por %p206, %p207
    %p209 = scmp.ne.s32.totalorder %s200, %s201
    %p210 = scmp.eq.s32.totalorder %s26, 0
    %p211 = por %p209, %p210
    %p212 = scmp.ne.s32.totalorder %s200, %s201
    %p213 = scmp.eq.s32.totalorder %s27, 8
    %p214 = por %p212, %p213
    %p216 = scmp.ne.s32.totalorder %s201, %s215
    %p217 = scmp.eq.s32.totalorder %s27, 0
    %p218 = por %p216, %p217
    %s220 = sadd.s32 %s219, 1
    %p223 = scmp.eq.s32.totalorder %s21, 8
    %p224 = scmp.ne.s32.totalorder %s219, %s221
    %p225 = scmp.eq.s32.totalorder %s21, 0
    %p226 = por %p224, %p225
    %p227 = scmp.ne.s32.totalorder %s219, %s221
    %p228 = scmp.eq.s32.totalorder %s26, 8
    %p229 = por %p227, %p228
    %p230 = scmp.ne.s32.totalorder %s221, %s222
    %p231 = scmp.eq.s32.totalorder %s26, 0
    %p232 = por %p230, %p231
    %p233 = scmp.ne.s32.totalorder %s221, %s222
    %p234 = scmp.eq.s32.totalorder %s27, 8
    %p235 = por %p233, %p234
    %p237 = scmp.ne.s32.totalorder %s222, %s236
    %p238 = scmp.eq.s32.totalorder %s27, 0
    %p239 = por %p237, %p238
    %p240 = scmp.le.s32.totalorder 1, %s21
    %p241 = scmp.lt.s32.totalorder %s21, 10
    %p242 = pnand %p240, %p241
    %p243 = pneg %p242
    // Predicated region
    $region9: #{obj_graph_forward.3} parent=5 // pred_check
      _
    $region10: #{obj_graph_forward.3} parent=5 // pred_check_branch
      %245 = sbr.rel (%p242) target = $region12
    $region11: #{obj_graph_forward.3} parent=5 // pred_region
      %s246 = ssub.s32 %s21, 1
      // Predicated region
      $region13: #{obj_graph_forward.3} parent=11 // pred_check
        %p247 = pneg %p106
      $region14: #{obj_graph_forward.3} parent=11 // pred_check_branch
        %249 = sbr.rel (%p247) target = $region16
      $region15: #{obj_graph_forward.3} parent=11 // pred_region
        _
      $region16: #{obj_graph_forward.3} parent=11 // pred_fallthru
        _
      // Predicated region
      $region17: #{obj_graph_forward.3} parent=11 // pred_check
        %p250 = pneg %p127
      $region18: #{obj_graph_forward.3} parent=11 // pred_check_branch
        %252 = sbr.rel (%p250) target = $region20
      $region19: #{obj_graph_forward.3} parent=11 // pred_region
        _
      $region20: #{obj_graph_forward.3} parent=11 // pred_fallthru
        _
      // Predicated region
      $region21: #{obj_graph_forward.3} parent=11 // pred_check
        %p253 = pneg %p148
      $region22: #{obj_graph_forward.3} parent=11 // pred_check_branch
        %255 = sbr.rel (%p253) target = $region24
      $region23: #{obj_graph_forward.3} parent=11 // pred_region
        _
      $region24: #{obj_graph_forward.3} parent=11 // pred_fallthru
        _
      // Predicated region
      $region25: #{obj_graph_forward.3} parent=11 // pred_check
        %p256 = pneg %p169
      $region26: #{obj_graph_forward.3} parent=11 // pred_check_branch
        %258 = sbr.rel (%p256) target = $region28
      $region27: #{obj_graph_forward.3} parent=11 // pred_region
        _
      $region28: #{obj_graph_forward.3} parent=11 // pred_fallthru
        _
      // Predicated region
      $region29: #{obj_graph_forward.3} parent=11 // pred_check
        %p259 = pneg %p190
      $region30: #{obj_graph_forward.3} parent=11 // pred_check_branch
        %261 = sbr.rel (%p259) target = $region32
      $region31: #{obj_graph_forward.3} parent=11 // pred_region
        _
      $region32: #{obj_graph_forward.3} parent=11 // pred_fallthru
        _
      // Predicated region
      $region33: #{obj_graph_forward.3} parent=11 // pred_check
        %p262 = pneg %p211
      $region34: #{obj_graph_forward.3} parent=11 // pred_check_branch
        %264 = sbr.rel (%p262) target = $region36
      $region35: #{obj_graph_forward.3} parent=11 // pred_region
        _
      $region36: #{obj_graph_forward.3} parent=11 // pred_fallthru
        _
    $region12: #{obj_graph_forward.3} parent=5 // pred_fallthru
      _
    %p265 = scmp.lt.s32.totalorder %s21, 9
    // Predicated region
    $region37: #{obj_graph_forward.3} parent=5 // pred_check
      %p266 = pneg %p265
    $region38: #{obj_graph_forward.3} parent=5 // pred_check_branch
      %268 = sbr.rel (%p266) target = $region40
    $region39: #{obj_graph_forward.3} parent=5 // pred_region
      // Predicated region
      $region41: #{obj_graph_forward.3} parent=39 // pred_check
        %p269 = pneg %p53
      $region42: #{obj_graph_forward.3} parent=39 // pred_check_branch
        %271 = sbr.rel (%p269) target = $region44
      $region43: #{obj_graph_forward.3} parent=39 // pred_region
        %s272 = smul.u32 2, %s29
        %p273 = scmp.lt.s32.totalorder %s272, 5
        %s274 = scalar_select %p273, %s272, 5
        %s275 = smul.addr %s274, 8
        %s276 = scalar_lea.vmem %s1, %s275
        %s277 = smul.u32 2, %s29
      $region44: #{obj_graph_forward.3} parent=39 // pred_fallthru
        _
      // Predicated region
      $region45: #{obj_graph_forward.3} parent=39 // pred_check
        %p278 = pneg %p79
      $region46: #{obj_graph_forward.3} parent=39 // pred_check_branch
        %280 = sbr.rel (%p278) target = $region48
      $region47: #{obj_graph_forward.3} parent=39 // pred_region
        %s281 = smul.u32 2, %s29
        %p282 = scmp.lt.s32.totalorder %s281, 5
        %s283 = scalar_select %p282, %s281, 5
        %s284 = smul.addr %s283, 8
        %s285 = scalar_lea.vmem %s2, %s284
        %s286 = smul.u32 2, %s29
      $region48: #{obj_graph_forward.3} parent=39 // pred_fallthru
        _
    $region40: #{obj_graph_forward.3} parent=5 // pred_fallthru
      _
    %p287 = scmp.le.s32.totalorder 1, %s21
    %p288 = scmp.lt.s32.totalorder %s21, 10
    %p289 = pnand %p287, %p288
    %p290 = pneg %p289
    // Predicated region
    $region49: #{obj_graph_forward.3} parent=5 // pred_check
      _
    $region50: #{obj_graph_forward.3} parent=5 // pred_check_branch
      %292 = sbr.rel (%p289) target = $region52
    $region51: #{obj_graph_forward.3} parent=5 // pred_region
      %s293 = ssub.s32 %s21, 1
      %s294 = smul.u32 2, %s31
      %p295 = scmp.lt.s32.totalorder %s294, 5
      %s296 = scalar_select %p295, %s294, 5
      %s297 = smul.addr %s296, 8
      %s298 = scalar_lea.vmem %s1, %s297
      %p299 = pneg %p59
      %p300 = pneg %p56
      %s301 = smul.u32 2, %s31
      %p302 = scmp.lt.s32.totalorder %s301, 5
      %s303 = scalar_select %p302, %s301, 5
      %s304 = smul.addr %s303, 8
      %s305 = scalar_lea.vmem %s2, %s304
      %p306 = pneg %p85
      %p307 = pneg %p82
      %p308 = pneg %p106
      %p309 = pneg %p103
      %p310 = pneg %p127
      %p311 = pneg %p124
      %p312 = pneg %p148
      %p313 = pneg %p145
      %p314 = pneg %p169
      %p315 = pneg %p166
      %p316 = pneg %p190
      %p317 = pneg %p187
      %p318 = pneg %p211
      %p319 = pneg %p208
      %p320 = pneg %p232
      %p321 = pneg %p229
      %s322 = smul.u32 2, %s31
      %p323 = scmp.lt.s32.totalorder %s322, 5
      %s324 = scalar_select %p323, %s322, 5
      %s325 = smul.addr %s324, 8
      %s326 = scalar_lea.vmem %s1, %s325
      %s327 = smul.u32 2, %s31
      %s328 = smul.u32 2, %s31
      %p329 = scmp.lt.s32.totalorder %s328, 5
      %s330 = scalar_select %p329, %s328, 5
      %s331 = smul.addr %s330, 8
      %s332 = scalar_lea.vmem %s2, %s331
      %s333 = smul.u32 2, %s31
      %p335 = scmp.eq.s32.totalorder %s30, 0
      %p336 = scmp.eq.s32.totalorder %s31, 0
      %p337 = pnand %p335, %p336
      %p338 = pneg %p337
      // Predicated region
      $region53: #{obj_graph_forward.3} parent=51 // pred_check
        _
      $region54: #{obj_graph_forward.3} parent=51 // pred_check_branch
        %340 = sbr.rel (%p337) target = $region56
      $region55: #{obj_graph_forward.3} parent=51 // pred_region
        %vm341 = vcmask 778240
        %342 = vst.msk [vmem:[#allocation2] sm:$0x1] %vm341, 0.0
        %343 = vst.msk [vmem:[#allocation3] sm:$0x1] %vm341, 0.0
        %vm344 = vcmask 253952
        %345 = vst.msk [vmem:[#allocation4] sm:$0x1] %vm344, 0.0
        %346 = vst.msk [vmem:[#allocation5] sm:$0x1] %vm344, 0.0
        %vm347 = vcmask 0
        %348 = vst.msk [vmem:[#allocation6] sm:$0x1] %vm347, 0.0
        %349 = vst.msk [vmem:[#allocation11] sm:$0x1] %vm344, -1e+30
        %350 = vst.msk [vmem:[#allocation11 + $0x1] sm:$0x1] %vm344, -1e+30
        %351 = vst.msk [vmem:[#allocation11 + $0x2] sm:$0x1] %vm344, -1e+30
        %352 = vst.msk [vmem:[#allocation11 + $0x3] sm:$0x1] %vm344, -1e+30
        %353 = vst.msk [vmem:[#allocation11 + $0x4] sm:$0x1] %vm344, -1e+30
        %354 = vst.msk [vmem:[#allocation11 + $0x5] sm:$0x1] %vm344, -1e+30
        %355 = vst.msk [vmem:[#allocation11 + $0x6] sm:$0x1] %vm344, -1e+30
        %356 = vst.msk [vmem:[#allocation11 + $0x7] sm:$0x1] %vm344, -1e+30
        %357 = vst.msk [vmem:[#allocation11 + $0x8] sm:$0x1] %vm344, -1e+30
        %358 = vst.msk [vmem:[#allocation11 + $0x9] sm:$0x1] %vm344, -1e+30
        %359 = vst.msk [vmem:[#allocation11 + $0xa] sm:$0x1] %vm344, -1e+30
        %360 = vst.msk [vmem:[#allocation11 + $0xb] sm:$0x1] %vm344, -1e+30
        %361 = vst.msk [vmem:[#allocation11 + $0xc] sm:$0x1] %vm344, -1e+30
        %362 = vst.msk [vmem:[#allocation11 + $0xd] sm:$0x1] %vm344, -1e+30
        %363 = vst.msk [vmem:[#allocation11 + $0xe] sm:$0x1] %vm344, -1e+30
        %364 = vst.msk [vmem:[#allocation11 + $0xf] sm:$0x1] %vm344, -1e+30
        %365 = vst.msk [vmem:[#allocation11 + $0x10] sm:$0x1] %vm344, -1e+30
      $region56: #{obj_graph_forward.3} parent=51 // pred_fallthru
        _
      %v366 = vld [vmem:[%s332] sm:$0xff]
      %v367 = vld [vmem:[%s332 + $0x8] sm:$0xff]
      %v368 = vld [vmem:[%s326] sm:$0xff]
      %v369 = vld [vmem:[%s326 + $0x8] sm:$0xff]
      %v370 = vmax.f32 %v368, 0.0
      %v371 = vmax.f32 %v369, 0.0
      // Predicated region
      $region57: #{obj_graph_forward.3} parent=51 // pred_check
        %p372 = pneg %p335
      $region58: #{obj_graph_forward.3} parent=51 // pred_check_branch
        %374 = sbr.rel (%p372) target = $region60
      $region59: #{obj_graph_forward.3} parent=51 // pred_region
        %376 = vset.pattern.permute.xlu0 0
        %377 = vperm.xlu0 %376, %v366
        %v378 = vpop.permute.xlu0 %377
        %381 = vset.pattern.permute.xlu0 0
        %382 = vperm.xlu0 %381, %v367
        %v383 = vpop.permute.xlu0 %382
        %v385 = vmul.f32 %v370, %v378
        %v386 = vmul.f32 %v371, %v383
        %v387 = vld [vmem:[#allocation2] sm:$0x1]
        %vm388 = vcmask 785408
        %v389 = vsel %vm388, %v385, 0.0
        %v390 = vsel %vm388, %v386, 0.0
        %v391 = vadd.f32 %v389, %v390
        %v392 = vrot.slane %v391, 4
        %v393 = vadd.f32 %v391, %v392
        %v394 = vrot.slane %v393, 2
        %v395 = vadd.f32 %v393, %v394
        %v396 = vrot.slane %v395, 1
        %v397 = vadd.f32 %v395, %v396
        %v398 = vadd.f32 %v387, %v397
        %vm399 = vcmask 778240
        %400 = vst.msk [vmem:[#allocation2] sm:$0x1] %vm399, %v398
        %v401 = vld [vmem:[#allocation3] sm:$0x1]
        %v402 = vmul.f32 %v370, %v385
        %v403 = vmul.f32 %v371, %v386
        %v404 = vsel %vm388, %v402, 0.0
        %v405 = vsel %vm388, %v403, 0.0
        %v406 = vadd.f32 %v404, %v405
        %v407 = vrot.slane %v406, 4
        %v408 = vadd.f32 %v406, %v407
        %v409 = vrot.slane %v408, 2
        %v410 = vadd.f32 %v408, %v409
        %v411 = vrot.slane %v410, 1
        %v412 = vadd.f32 %v410, %v411
        %v413 = vadd.f32 %v401, %v412
        %414 = vst.msk [vmem:[#allocation3] sm:$0x1] %vm399, %v413
        %v415 = vld [vmem:[#allocation6] sm:$0x1]
        %vm416 = vcmask 7168
        %v417 = vsel %vm416, %v366, 0.0
        %v418 = vsel %vm416, %v367, 0.0
        %v419 = vadd.f32 %v417, %v418
        %v420 = vrot.slane %v419, 4
        %v421 = vadd.f32 %v419, %v420
        %v422 = vrot.slane %v421, 2
        %v423 = vadd.f32 %v421, %v422
        %v424 = vrot.slane %v423, 1
        %v425 = vadd.f32 %v423, %v424
        %v426 = vadd.f32 %v415, %v425
        %vm427 = vcmask 0
        %428 = vst.msk [vmem:[#allocation6] sm:$0x1] %vm427, %v426
      $region60: #{obj_graph_forward.3} parent=51 // pred_fallthru
        _
      %p429 = scmp.eq.s32.totalorder %s31, 2
      %p430 = pnand %p335, %p429
      %p431 = pneg %p430
      // Predicated region
      $region61: #{obj_graph_forward.3} parent=51 // pred_check
        _
      $region62: #{obj_graph_forward.3} parent=51 // pred_check_branch
        %433 = sbr.rel (%p430) target = $region64
      $region63: #{obj_graph_forward.3} parent=51 // pred_region
        %v434 = vld [vmem:[#allocation6] sm:$0x1]
        %v435 = vmax.f32 %v434, 1.0
        %v436 = vrcp.pop %v435
        %v437 = vmul.f32 1.0, %v436
        %v438 = vld [vmem:[#allocation2] sm:$0x1]
        %440 = vset.pattern.permute.xlu0 0
        %441 = vperm.xlu0 %440, %v437
        %v442 = vpop.permute.xlu0 %441
        %v444 = vlaneseq
        %v445 = vshrl.u32 %v444, 7
        %v446 = vsub.s32 0, %v445
        %v447 = vrot.slane %v442, %v446
        %v448 = vmul.f32 %v438, %v447
        %v449 = vld [vmem:[#allocation3] sm:$0x1]
        %v450 = vmul.f32 %v449, %v447
        %v451 = vmul.f32 %v448, %v448
        %v452 = vsub.f32 %v450, %v451
        %v453 = vmax.f32 %v452, 0.0
        %v454 = vld [vmem:[%s5] sm:$0x1]
        %v455 = vadd.f32 %v453, 1e-05
        %v456 = vrsqrt.pop %v455
        %v457 = vmul.f32 %v454, %v456
        %vm458 = vcmask 778240
        %459 = vst.msk [vmem:[#allocation7] sm:$0x1] %vm458, %v457
        %v460 = vld [vmem:[%s6] sm:$0x1]
        %v461 = vmul.f32 %v448, %v457
        %v462 = vsub.f32 %v460, %v461
        %463 = vst.msk [vmem:[#allocation8] sm:$0x1] %vm458, %v462
      $region64: #{obj_graph_forward.3} parent=51 // pred_fallthru
        _
      %p464 = scmp.eq.s32.totalorder %s30, 1
      // Predicated region
      $region65: #{obj_graph_forward.3} parent=51 // pred_check
        %p465 = pneg %p464
      $region66: #{obj_graph_forward.3} parent=51 // pred_check_branch
        %467 = sbr.rel (%p465) target = $region68
      $region67: #{obj_graph_forward.3} parent=51 // pred_region
        %v468 = vld [vmem:[#allocation7] sm:$0x1]
        %v470 = vlaneseq
        %v471 = vshrl.u32 %v470, 7
        %v472 = vsub.s32 0, %v471
        %v473 = vrot.slane %v468, %v472
        %v475 = vmul.f32 %v370, %v473
        %v476 = vmul.f32 %v371, %v473
        %v477 = vld [vmem:[#allocation8] sm:$0x1]
        %v479 = vlaneseq
        %v480 = vshrl.u32 %v479, 7
        %v481 = vsub.s32 0, %v480
        %v482 = vrot.slane %v477, %v481
        %v484 = vadd.f32 %v475, %v482
        %v485 = vadd.f32 %v476, %v482
        %v486 = vpack.c.bf16 %v485, %v484
        %v487 = vld [vmem:[%s3] sm:$0xff]
        %v488 = vld [vmem:[%s3 + $0x8] sm:$0xff]
        %v489 = vld [vmem:[%s3 + $0x10] sm:$0xff]
        %v490 = vld [vmem:[%s3 + $0x18] sm:$0xff]
        %v491 = vld [vmem:[%s3 + $0x20] sm:$0xff]
        %v492 = vld [vmem:[%s3 + $0x28] sm:$0xff]
        %v493 = vld [vmem:[%s3 + $0x30] sm:$0xff]
        %v494 = vld [vmem:[%s3 + $0x38] sm:$0xff]
        %v495 = vld [vmem:[%s3 + $0x40] sm:$0xff]
        %v496 = vld [vmem:[%s3 + $0x48] sm:$0xff]
        %v497 = vld [vmem:[%s3 + $0x50] sm:$0xff]
        %v498 = vld [vmem:[%s3 + $0x58] sm:$0xff]
        %v499 = vpack.c.bf16 %v488, %v487
        %v500 = vpack.c.bf16 %v490, %v489
        %v501 = vpack.c.bf16 %v492, %v491
        %v502 = vpack.c.bf16 %v494, %v493
        %v503 = vpack.c.bf16 %v496, %v495
        %v504 = vpack.c.bf16 %v498, %v497
        %v505 = vld [vmem:[%s4] sm:$0x1]
        %v507 = vlaneseq
        %v508 = vshrl.u32 %v507, 7
        %v509 = vsub.s32 0, %v508
        %v510 = vrot.slane %v505, %v509
        %vm512 = vcmask 785408
        %v514 = vsel %vm512, %v486, 0
        %516 = vmatprep.subr.bf16.mxu0 0
        %517 = vmatpush1.bf16.msra.mxu0 0
        %518 = vmatprep.subr.bf16.mxu0 0
        %519 = vmatpush1.bf16.msra.mxu0 0
        %520 = vmatprep.subr.bf16.mxu0 0
        %521 = vmatpush1.bf16.msra.mxu0 %v504
        %522 = vmatprep.subr.bf16.mxu0 0
        %523 = vmatpush1.bf16.msra.mxu0 %v503
        %524 = vmatprep.subr.bf16.mxu0 0
        %525 = vmatpush1.bf16.msra.mxu0 %v502
        %526 = vmatprep.subr.bf16.mxu0 0
        %527 = vmatpush1.bf16.msra.mxu0 %v501
        %528 = vmatprep.subr.bf16.mxu0 0
        %529 = vmatpush1.bf16.msra.mxu0 %v500
        %530 = vmatprep.subr.bf16.mxu0 0
        %531 = vmatpush1.bf16.msra.mxu0 %v499
        %532 = vmatprep.subr.bf16.mxu0 0
        %533 = vmatpush2.bf16.msra.mxu0 0
        %534 = vmatprep.subr.bf16.mxu0 0
        %535 = vmatpush2.bf16.msra.mxu0 0
        %536 = vmatprep.subr.bf16.mxu0 0
        %537 = vmatpush2.bf16.msra.mxu0 0
        %538 = vmatprep.subr.bf16.mxu0 0
        %539 = vmatpush2.bf16.msra.mxu0 0
        %540 = vmatprep.subr.bf16.mxu0 0
        %541 = vmatpush2.bf16.msra.mxu0 0
        %542 = vmatprep.subr.bf16.mxu0 0
        %543 = vmatpush2.bf16.msra.mxu0 0
        %544 = vmatprep.subr.bf16.mxu0 0
        %545 = vmatpush2.bf16.msra.mxu0 0
        %546 = vmatprep.subr.bf16.mxu0 0
        %547 = vmatpush2.bf16.msra.mxu0 0
        %548 = vmatprep.mubr.bf16.mxu0 0
        %549 = vmatmul.mubr.bf16.gmra.mxu0 %v514
        %v550 = vpop.f32.mrf.mxu0
        %v551 = vadd.f32 %v510, %v550
        %v552 = vpop.f32.mrf.mxu0
        %v553 = vpop.f32.mrf.mxu0
        %v554 = vadd.f32 %v510, %v553
        %v555 = vpop.f32.mrf.mxu0
        %556 = vdwg.mxu0
        %v557 = vmax.f32 %v551, 0.0
        %v558 = vmax.f32 %v554, 0.0
        %560 = vset.pattern.permute.xlu0 0
        %561 = vperm.xlu0 %560, %v366
        %v562 = vpop.permute.xlu0 %561
        %565 = vset.pattern.permute.xlu0 0
        %566 = vperm.xlu0 %565, %v367
        %v567 = vpop.permute.xlu0 %566
        %v569 = vmul.f32 %v557, %v562
        %v570 = vmul.f32 %v558, %v567
        %v571 = vld [vmem:[#allocation4] sm:$0x1]
        %vm572 = vcmask 261120
        %v573 = vsel %vm572, %v569, 0.0
        %v574 = vsel %vm572, %v570, 0.0
        %v575 = vadd.f32 %v573, %v574
        %v576 = vrot.slane %v575, 4
        %v577 = vadd.f32 %v575, %v576
        %v578 = vrot.slane %v577, 2
        %v579 = vadd.f32 %v577, %v578
        %v580 = vrot.slane %v579, 1
        %v581 = vadd.f32 %v579, %v580
        %v582 = vadd.f32 %v571, %v581
        %vm583 = vcmask 253952
        %584 = vst.msk [vmem:[#allocation4] sm:$0x1] %vm583, %v582
        %v585 = vld [vmem:[#allocation5] sm:$0x1]
        %v586 = vmul.f32 %v557, %v569
        %v587 = vmul.f32 %v558, %v570
        %v588 = vsel %vm572, %v586, 0.0
        %v589 = vsel %vm572, %v587, 0.0
        %v590 = vadd.f32 %v588, %v589
        %v591 = vrot.slane %v590, 4
        %v592 = vadd.f32 %v590, %v591
        %v593 = vrot.slane %v592, 2
        %v594 = vadd.f32 %v592, %v593
        %v595 = vrot.slane %v594, 1
        %v596 = vadd.f32 %v594, %v595
        %v597 = vadd.f32 %v585, %v596
        %598 = vst.msk [vmem:[#allocation5] sm:$0x1] %vm583, %v597
      $region68: #{obj_graph_forward.3} parent=51 // pred_fallthru
        _
      %p599 = pnand %p464, %p429
      %p600 = pneg %p599
      // Predicated region
      $region69: #{obj_graph_forward.3} parent=51 // pred_check
        _
      $region70: #{obj_graph_forward.3} parent=51 // pred_check_branch
        %602 = sbr.rel (%p599) target = $region72
      $region71: #{obj_graph_forward.3} parent=51 // pred_region
        %v603 = vld [vmem:[#allocation6] sm:$0x1]
        %v604 = vmax.f32 %v603, 1.0
        %v605 = vrcp.pop %v604
        %v606 = vmul.f32 1.0, %v605
        %v607 = vld [vmem:[#allocation4] sm:$0x1]
        %609 = vset.pattern.permute.xlu0 0
        %610 = vperm.xlu0 %609, %v606
        %v611 = vpop.permute.xlu0 %610
        %v613 = vlaneseq
        %v614 = vshrl.u32 %v613, 7
        %v615 = vsub.s32 0, %v614
        %v616 = vrot.slane %v611, %v615
        %v617 = vmul.f32 %v607, %v616
        %v618 = vld [vmem:[#allocation5] sm:$0x1]
        %v619 = vmul.f32 %v618, %v616
        %v620 = vmul.f32 %v617, %v617
        %v621 = vsub.f32 %v619, %v620
        %v622 = vmax.f32 %v621, 0.0
        %v623 = vld [vmem:[%s7] sm:$0x1]
        %v624 = vadd.f32 %v622, 1e-05
        %v625 = vrsqrt.pop %v624
        %v626 = vmul.f32 %v623, %v625
        %vm627 = vcmask 253952
        %628 = vst.msk [vmem:[#allocation9] sm:$0x1] %vm627, %v626
        %v629 = vld [vmem:[%s8] sm:$0x1]
        %v630 = vmul.f32 %v617, %v626
        %v631 = vsub.f32 %v629, %v630
        %632 = vst.msk [vmem:[#allocation10] sm:$0x1] %vm627, %v631
      $region72: #{obj_graph_forward.3} parent=51 // pred_fallthru
        _
      %p633 = scmp.eq.s32.totalorder %s30, 2
      // Predicated region
      $region73: #{obj_graph_forward.3} parent=51 // pred_check
        %p634 = pneg %p633
      $region74: #{obj_graph_forward.3} parent=51 // pred_check_branch
        %636 = sbr.rel (%p634) target = $region76
      $region75: #{obj_graph_forward.3} parent=51 // pred_region
        %v637 = vld [vmem:[#allocation7] sm:$0x1]
        %v639 = vlaneseq
        %v640 = vshrl.u32 %v639, 7
        %v641 = vsub.s32 0, %v640
        %v642 = vrot.slane %v637, %v641
        %v644 = vmul.f32 %v370, %v642
        %v645 = vmul.f32 %v371, %v642
        %v646 = vld [vmem:[#allocation8] sm:$0x1]
        %v648 = vlaneseq
        %v649 = vshrl.u32 %v648, 7
        %v650 = vsub.s32 0, %v649
        %v651 = vrot.slane %v646, %v650
        %v653 = vadd.f32 %v644, %v651
        %v654 = vadd.f32 %v645, %v651
        %v655 = vpack.c.bf16 %v654, %v653
        %v656 = vld [vmem:[%s3] sm:$0xff]
        %v657 = vld [vmem:[%s3 + $0x8] sm:$0xff]
        %v658 = vld [vmem:[%s3 + $0x10] sm:$0xff]
        %v659 = vld [vmem:[%s3 + $0x18] sm:$0xff]
        %v660 = vld [vmem:[%s3 + $0x20] sm:$0xff]
        %v661 = vld [vmem:[%s3 + $0x28] sm:$0xff]
        %v662 = vld [vmem:[%s3 + $0x30] sm:$0xff]
        %v663 = vld [vmem:[%s3 + $0x38] sm:$0xff]
        %v664 = vld [vmem:[%s3 + $0x40] sm:$0xff]
        %v665 = vld [vmem:[%s3 + $0x48] sm:$0xff]
        %v666 = vld [vmem:[%s3 + $0x50] sm:$0xff]
        %v667 = vld [vmem:[%s3 + $0x58] sm:$0xff]
        %v668 = vpack.c.bf16 %v657, %v656
        %v669 = vpack.c.bf16 %v659, %v658
        %v670 = vpack.c.bf16 %v661, %v660
        %v671 = vpack.c.bf16 %v663, %v662
        %v672 = vpack.c.bf16 %v665, %v664
        %v673 = vpack.c.bf16 %v667, %v666
        %v674 = vld [vmem:[%s4] sm:$0x1]
        %v676 = vlaneseq
        %v677 = vshrl.u32 %v676, 7
        %v678 = vsub.s32 0, %v677
        %v679 = vrot.slane %v674, %v678
        %vm681 = vcmask 785408
        %v683 = vsel %vm681, %v655, 0
        %685 = vmatprep.subr.bf16.mxu0 0
        %686 = vmatpush1.bf16.msra.mxu0 0
        %687 = vmatprep.subr.bf16.mxu0 0
        %688 = vmatpush1.bf16.msra.mxu0 0
        %689 = vmatprep.subr.bf16.mxu0 0
        %690 = vmatpush1.bf16.msra.mxu0 %v673
        %691 = vmatprep.subr.bf16.mxu0 0
        %692 = vmatpush1.bf16.msra.mxu0 %v672
        %693 = vmatprep.subr.bf16.mxu0 0
        %694 = vmatpush1.bf16.msra.mxu0 %v671
        %695 = vmatprep.subr.bf16.mxu0 0
        %696 = vmatpush1.bf16.msra.mxu0 %v670
        %697 = vmatprep.subr.bf16.mxu0 0
        %698 = vmatpush1.bf16.msra.mxu0 %v669
        %699 = vmatprep.subr.bf16.mxu0 0
        %700 = vmatpush1.bf16.msra.mxu0 %v668
        %701 = vmatprep.subr.bf16.mxu0 0
        %702 = vmatpush2.bf16.msra.mxu0 0
        %703 = vmatprep.subr.bf16.mxu0 0
        %704 = vmatpush2.bf16.msra.mxu0 0
        %705 = vmatprep.subr.bf16.mxu0 0
        %706 = vmatpush2.bf16.msra.mxu0 0
        %707 = vmatprep.subr.bf16.mxu0 0
        %708 = vmatpush2.bf16.msra.mxu0 0
        %709 = vmatprep.subr.bf16.mxu0 0
        %710 = vmatpush2.bf16.msra.mxu0 0
        %711 = vmatprep.subr.bf16.mxu0 0
        %712 = vmatpush2.bf16.msra.mxu0 0
        %713 = vmatprep.subr.bf16.mxu0 0
        %714 = vmatpush2.bf16.msra.mxu0 0
        %715 = vmatprep.subr.bf16.mxu0 0
        %716 = vmatpush2.bf16.msra.mxu0 0
        %717 = vmatprep.mubr.bf16.mxu0 0
        %718 = vmatmul.mubr.bf16.gmra.mxu0 %v683
        %v719 = vpop.f32.mrf.mxu0
        %v720 = vadd.f32 %v679, %v719
        %v721 = vpop.f32.mrf.mxu0
        %v722 = vpop.f32.mrf.mxu0
        %v723 = vadd.f32 %v679, %v722
        %v724 = vpop.f32.mrf.mxu0
        %725 = vdwg.mxu0
        %v726 = vmax.f32 %v720, 0.0
        %v727 = vmax.f32 %v723, 0.0
        %v728 = vld [vmem:[#allocation9] sm:$0x1]
        %v730 = vlaneseq
        %v731 = vshrl.u32 %v730, 7
        %v732 = vsub.s32 0, %v731
        %v733 = vrot.slane %v728, %v732
        %v735 = vmul.f32 %v726, %v733
        %v736 = vmul.f32 %v727, %v733
        %v737 = vld [vmem:[#allocation10] sm:$0x1]
        %v739 = vlaneseq
        %v740 = vshrl.u32 %v739, 7
        %v741 = vsub.s32 0, %v740
        %v742 = vrot.slane %v737, %v741
        %v744 = vadd.f32 %v735, %v742
        %v745 = vadd.f32 %v736, %v742
        %v748 = vcombine.high %v744, %v744
        %v750 = vunpack.c.l.s4 1966171168
        %v751 = vunpack.c.0.s8 %v750
        %v752 = vlaneseq
        %v753 = vshrl.u32 %v752, 7
        %v754 = vsub.s32 %v751, %v753
        %v755 = vrot.slane %v744, %v754
        %v757 = vunpack.c.l.s4 1966171168
        %v758 = vunpack.c.0.s8 %v757
        %v759 = vlaneseq
        %v760 = vshrl.u32 %v759, 7
        %v761 = vsub.s32 %v758, %v760
        %v762 = vrot.slane %v748, %v761
        %v763 = vcombine.high %v755, %v755
        %v764 = vcombine.high %v762, %v762
        %v766 = vunpack.c.l.s4 1966171168
        %v767 = vunpack.c.0.s8 %v766
        %v768 = vlaneseq
        %v769 = vshrl.u32 %v768, 7
        %v770 = vsub.s32 %v767, %v769
        %v771 = vrot.slane %v755, %v770
        %v773 = vunpack.c.l.s4 1966171168
        %v774 = vunpack.c.0.s8 %v773
        %v775 = vlaneseq
        %v776 = vshrl.u32 %v775, 7
        %v777 = vsub.s32 %v774, %v776
        %v778 = vrot.slane %v762, %v777
        %v780 = vunpack.c.l.s4 1966171168
        %v781 = vunpack.c.0.s8 %v780
        %v782 = vlaneseq
        %v783 = vshrl.u32 %v782, 7
        %v784 = vsub.s32 %v781, %v783
        %v785 = vrot.slane %v763, %v784
        %v787 = vunpack.c.l.s4 1966171168
        %v788 = vunpack.c.0.s8 %v787
        %v789 = vlaneseq
        %v790 = vshrl.u32 %v789, 7
        %v791 = vsub.s32 %v788, %v790
        %v792 = vrot.slane %v764, %v791
        %v793 = vcombine.high %v771, %v771
        %v794 = vcombine.high %v778, %v778
        %v795 = vcombine.high %v785, %v785
        %v796 = vcombine.high %v792, %v792
        %v797 = vcombine.high %v745, %v745
        %v799 = vunpack.c.l.s4 1966171168
        %v800 = vunpack.c.0.s8 %v799
        %v801 = vlaneseq
        %v802 = vshrl.u32 %v801, 7
        %v803 = vsub.s32 %v800, %v802
        %v804 = vrot.slane %v745, %v803
        %v806 = vunpack.c.l.s4 1966171168
        %v807 = vunpack.c.0.s8 %v806
        %v808 = vlaneseq
        %v809 = vshrl.u32 %v808, 7
        %v810 = vsub.s32 %v807, %v809
        %v811 = vrot.slane %v797, %v810
        %v812 = vcombine.high %v804, %v804
        %v813 = vcombine.high %v811, %v811
        %v815 = vunpack.c.l.s4 1966171168
        %v816 = vunpack.c.0.s8 %v815
        %v817 = vlaneseq
        %v818 = vshrl.u32 %v817, 7
        %v819 = vsub.s32 %v816, %v818
        %v820 = vrot.slane %v804, %v819
        %v822 = vunpack.c.l.s4 1966171168
        %v823 = vunpack.c.0.s8 %v822
        %v824 = vlaneseq
        %v825 = vshrl.u32 %v824, 7
        %v826 = vsub.s32 %v823, %v825
        %v827 = vrot.slane %v811, %v826
        %v829 = vunpack.c.l.s4 1966171168
        %v830 = vunpack.c.0.s8 %v829
        %v831 = vlaneseq
        %v832 = vshrl.u32 %v831, 7
        %v833 = vsub.s32 %v830, %v832
        %v834 = vrot.slane %v812, %v833
        %v836 = vunpack.c.l.s4 1966171168
        %v837 = vunpack.c.0.s8 %v836
        %v838 = vlaneseq
        %v839 = vshrl.u32 %v838, 7
        %v840 = vsub.s32 %v837, %v839
        %v841 = vrot.slane %v813, %v840
        %v842 = vcombine.high %v820, %v820
        %v843 = vcombine.high %v827, %v827
        %v844 = vcombine.high %v834, %v834
        %v845 = vcombine.high %v841, %v841
        %vm862 = vcmask 253952
        %863 = vst.msk [vmem:[#allocation12] sm:$0x1] %vm862, %v771
        %864 = vst.msk [vmem:[#allocation12 + $0x1] sm:$0x1] %vm862, %v785
        %865 = vst.msk [vmem:[#allocation12 + $0x2] sm:$0x1] %vm862, %v793
        %866 = vst.msk [vmem:[#allocation12 + $0x3] sm:$0x1] %vm862, %v795
        %867 = vst.msk [vmem:[#allocation12 + $0x4] sm:$0x1] %vm862, %v778
        %868 = vst.msk [vmem:[#allocation12 + $0x5] sm:$0x1] %vm862, %v792
        %869 = vst.msk [vmem:[#allocation12 + $0x6] sm:$0x1] %vm862, %v794
        %870 = vst.msk [vmem:[#allocation12 + $0x7] sm:$0x1] %vm862, %v796
        %871 = vst.msk [vmem:[#allocation12 + $0x8] sm:$0x1] %vm862, %v820
        %872 = vst.msk [vmem:[#allocation12 + $0x9] sm:$0x1] %vm862, %v834
        %873 = vst.msk [vmem:[#allocation12 + $0xa] sm:$0x1] %vm862, %v842
        %874 = vst.msk [vmem:[#allocation12 + $0xb] sm:$0x1] %vm862, %v844
        %875 = vst.msk [vmem:[#allocation12 + $0xc] sm:$0x1] %vm862, %v827
        %876 = vst.msk [vmem:[#allocation12 + $0xd] sm:$0x1] %vm862, %v841
        %877 = vst.msk [vmem:[#allocation12 + $0xe] sm:$0x1] %vm862, %v843
        %878 = vst.msk [vmem:[#allocation12 + $0xf] sm:$0x1] %vm862, %v845
        %s879 = smul.u32 %s31, 16
        loop: start=0, step=1, limit=16
        $region77: #{obj_graph_forward.3} parent=75 // loop_pre_header
          _
        $region78: #{obj_graph_forward.3} parent=75 // loop_header
          %s881 = sphi 0, %s885
          %p882 = scmp.ge.s32.totalorder %s881, 16
        $region79: #{obj_graph_forward.3} parent=75 // loop_header_branch
          %884 = sbr.rel (%p882) target = $region83
        $region80: #{obj_graph_forward.3} parent=75 // loop_body
          %s886 = sadd.s32 %s879, %s881
          %s887 = sld [smem:[#allocation14 + %s886]]
          %s888 = scalar_lea.vmem [#allocation11], %s887
          %v889 = vld [vmem:[%s888] sm:$0x1]
          %s890 = scalar_lea.vmem [#allocation12], %s881
          %v891 = vld [vmem:[%s890] sm:$0x1]
          %v892 = vmax.f32 %v889, %v891
          %893 = vst.msk [vmem:[%s888] sm:$0x1] %vm862, %v892
        $region81: #{obj_graph_forward.3} parent=75 // loop_footer
          %s885 = sadd.s32 1, %s881
        $region82: #{obj_graph_forward.3} parent=75 // loop_footer_branch
          %880 = sbr.rel target = $region78
        $region83: #{obj_graph_forward.3} parent=75 // loop_exit
          _
      $region76: #{obj_graph_forward.3} parent=51 // pred_fallthru
        _
      %p894 = pnand %p633, %p429
      %p895 = pneg %p894
      // Predicated region
      $region84: #{obj_graph_forward.3} parent=51 // pred_check
        _
      $region85: #{obj_graph_forward.3} parent=51 // pred_check_branch
        %897 = sbr.rel (%p894) target = $region87
      $region86: #{obj_graph_forward.3} parent=51 // pred_region
        %v898 = vld [vmem:[#allocation11] sm:$0x1]
        %v899 = vld [vmem:[#allocation11 + $0x1] sm:$0x1]
        %v900 = vld [vmem:[#allocation11 + $0x2] sm:$0x1]
        %v901 = vld [vmem:[#allocation11 + $0x3] sm:$0x1]
        %v902 = vld [vmem:[#allocation11 + $0x4] sm:$0x1]
        %v903 = vld [vmem:[#allocation11 + $0x5] sm:$0x1]
        %v904 = vld [vmem:[#allocation11 + $0x6] sm:$0x1]
        %v905 = vld [vmem:[#allocation11 + $0x7] sm:$0x1]
        %v906 = vld [vmem:[#allocation11 + $0x8] sm:$0x1]
        %v907 = vld [vmem:[#allocation11 + $0x9] sm:$0x1]
        %v908 = vld [vmem:[#allocation11 + $0xa] sm:$0x1]
        %v909 = vld [vmem:[#allocation11 + $0xb] sm:$0x1]
        %v910 = vld [vmem:[#allocation11 + $0xc] sm:$0x1]
        %v911 = vld [vmem:[#allocation11 + $0xd] sm:$0x1]
        %v912 = vld [vmem:[#allocation11 + $0xe] sm:$0x1]
        %v913 = vld [vmem:[#allocation11 + $0xf] sm:$0x1]
        %v930 = vcombine.low %v898, %v899
        %v931 = vcombine.low %v900, %v901
        %v932 = vcombine.low %v902, %v903
        %v933 = vcombine.low %v904, %v905
        %v935 = vunpack.c.l.s4 1966171168
        %v936 = vunpack.c.0.s8 %v935
        %v937 = vlaneseq
        %v938 = vshrl.u32 %v937, 7
        %v939 = vsub.s32 %v936, %v938
        %v940 = vrot.slane %v930, %v939
        %v942 = vunpack.c.l.s4 1966171168
        %v943 = vunpack.c.0.s8 %v942
        %v944 = vlaneseq
        %v945 = vshrl.u32 %v944, 7
        %v946 = vsub.s32 %v943, %v945
        %v947 = vrot.slane %v931, %v946
        %v949 = vunpack.c.l.s4 1966171168
        %v950 = vunpack.c.0.s8 %v949
        %v951 = vlaneseq
        %v952 = vshrl.u32 %v951, 7
        %v953 = vsub.s32 %v950, %v952
        %v954 = vrot.slane %v932, %v953
        %v956 = vunpack.c.l.s4 1966171168
        %v957 = vunpack.c.0.s8 %v956
        %v958 = vlaneseq
        %v959 = vshrl.u32 %v958, 7
        %v960 = vsub.s32 %v957, %v959
        %v961 = vrot.slane %v933, %v960
        %v962 = vcombine.low %v940, %v947
        %v963 = vcombine.low %v954, %v961
        %v965 = vunpack.c.l.s4 1966171168
        %v966 = vunpack.c.0.s8 %v965
        %v967 = vlaneseq
        %v968 = vshrl.u32 %v967, 7
        %v969 = vsub.s32 %v966, %v968
        %v970 = vrot.slane %v962, %v969
        %v972 = vunpack.c.l.s4 1966171168
        %v973 = vunpack.c.0.s8 %v972
        %v974 = vlaneseq
        %v975 = vshrl.u32 %v974, 7
        %v976 = vsub.s32 %v973, %v975
        %v977 = vrot.slane %v963, %v976
        %v978 = vcombine.low %v970, %v977
        %v979 = vcombine.low %v906, %v907
        %v980 = vcombine.low %v908, %v909
        %v981 = vcombine.low %v910, %v911
        %v982 = vcombine.low %v912, %v913
        %v984 = vunpack.c.l.s4 1966171168
        %v985 = vunpack.c.0.s8 %v984
        %v986 = vlaneseq
        %v987 = vshrl.u32 %v986, 7
        %v988 = vsub.s32 %v985, %v987
        %v989 = vrot.slane %v979, %v988
        %v991 = vunpack.c.l.s4 1966171168
        %v992 = vunpack.c.0.s8 %v991
        %v993 = vlaneseq
        %v994 = vshrl.u32 %v993, 7
        %v995 = vsub.s32 %v992, %v994
        %v996 = vrot.slane %v980, %v995
        %v998 = vunpack.c.l.s4 1966171168
        %v999 = vunpack.c.0.s8 %v998
        %v1000 = vlaneseq
        %v1001 = vshrl.u32 %v1000, 7
        %v1002 = vsub.s32 %v999, %v1001
        %v1003 = vrot.slane %v981, %v1002
        %v1005 = vunpack.c.l.s4 1966171168
        %v1006 = vunpack.c.0.s8 %v1005
        %v1007 = vlaneseq
        %v1008 = vshrl.u32 %v1007, 7
        %v1009 = vsub.s32 %v1006, %v1008
        %v1010 = vrot.slane %v982, %v1009
        %v1011 = vcombine.low %v989, %v996
        %v1012 = vcombine.low %v1003, %v1010
        %v1014 = vunpack.c.l.s4 1966171168
        %v1015 = vunpack.c.0.s8 %v1014
        %v1016 = vlaneseq
        %v1017 = vshrl.u32 %v1016, 7
        %v1018 = vsub.s32 %v1015, %v1017
        %v1019 = vrot.slane %v1011, %v1018
        %v1021 = vunpack.c.l.s4 1966171168
        %v1022 = vunpack.c.0.s8 %v1021
        %v1023 = vlaneseq
        %v1024 = vshrl.u32 %v1023, 7
        %v1025 = vsub.s32 %v1022, %v1024
        %v1026 = vrot.slane %v1012, %v1025
        %v1027 = vcombine.low %v1019, %v1026
        %vm1030 = vcmask 261120
        %1031 = vst.msk [vmem:[%s9] sm:$0xff] %vm1030, %v978
        %1032 = vst.msk [vmem:[%s9 + $0x8] sm:$0xff] %vm1030, %v1027
      $region87: #{obj_graph_forward.3} parent=51 // pred_fallthru
        _
      // Predicated region
      $region88: #{obj_graph_forward.3} parent=51 // pred_check
        %p1033 = pneg %p229
      $region89: #{obj_graph_forward.3} parent=51 // pred_check_branch
        %1035 = sbr.rel (%p1033) target = $region91
      $region90: #{obj_graph_forward.3} parent=51 // pred_region
        _
      $region91: #{obj_graph_forward.3} parent=51 // pred_fallthru
        _
      // Predicated region
      $region92: #{obj_graph_forward.3} parent=51 // pred_check
        %p1036 = pneg %p229
      $region93: #{obj_graph_forward.3} parent=51 // pred_check_branch
        %1038 = sbr.rel (%p1036) target = $region95
      $region94: #{obj_graph_forward.3} parent=51 // pred_region
        _
      $region95: #{obj_graph_forward.3} parent=51 // pred_fallthru
        _
    $region52: #{obj_graph_forward.3} parent=5 // pred_fallthru
      _
    %p1039 = scmp.le.s32.totalorder 2, %s21
    // Predicated region
    $region96: #{obj_graph_forward.3} parent=5 // pred_check
      %p1040 = pneg %p1039
    $region97: #{obj_graph_forward.3} parent=5 // pred_check_branch
      %1042 = sbr.rel (%p1040) target = $region99
    $region98: #{obj_graph_forward.3} parent=5 // pred_region
      %s1043 = ssub.s32 %s21, 2
    $region99: #{obj_graph_forward.3} parent=5 // pred_fallthru
      _
  $region6: #{obj_graph_forward.3} parent=0 // loop_footer
    %s25 = sadd.s32 1, %s21
  $region7: #{obj_graph_forward.3} parent=0 // loop_footer_branch
    %20 = sbr.rel target = $region3
  $region8: #{obj_graph_forward.3} parent=0 // loop_exit
    _

</llo_original>
